<compile_context>
chip_gen: v6e
topology: v6e:2x2x1
jax: 0.10.0
libtpu: 0.0.40
codegen_flags: <defaults>
</compile_context>

<pallas_src>
import functools

import numpy as np
import jax
import jax.numpy as jnp
from jax import lax
from jax.experimental import pallas as pl
from jax.experimental.pallas import tpu as pltpu

NEG_SLOPE = 0.01  # F.leaky_relu default


def _basic_conv3d_kernel(x_ref, w_ref, o_ref, *, kd, kh, kw, hw, wdim, neg_slope):
    # x_ref block: (1, Cin, L) bf16, L = D*H*W (flattened spatial, lane axis)
    # w_ref:       (Cout, K)   bf16, K = KD*KH*KW*Cin, k = ((a*KH+b)*KW+c)*Cin + cin
    # o_ref block: (1, Cout, L) f32
    x = x_ref[0]          # (Cin, L)
    wf = w_ref[...]       # (Cout, K)

    # Build the im2col patch (K, L).  For tap (a,b,c) the flat source offset is
    # s = a*H*W + b*W + c; a left "roll" by s aligns x[.., m+s] with output
    # position m.  For every valid output position m (do<Do, ho<Ho, wo<Wo) we
    # have m + s < L, so the wrap-around only pollutes lanes that are cropped
    # away in the wrapper.  Lane rolls are XLU work and avoid any reshape.
    rows = []
    for a in range(kd):
        for b in range(kh):
            for c in range(kw):
                s = a * hw + b * wdim + c
                if s == 0:
                    rows.append(x)
                else:
                    rows.append(jnp.concatenate([x[:, s:], x[:, :s]], axis=-1))
    patch = jnp.concatenate(rows, axis=0)               # (K, L) bf16

    # Single fused contraction on the MXU: (Cout, K) x (K, L) -> (Cout, L) f32.
    acc = jnp.dot(wf, patch, preferred_element_type=jnp.float32)

    # leaky_relu (negative_slope = 0.01, matching F.leaky_relu default).
    y = jnp.where(acc > 0, acc, neg_slope * acc)
    o_ref[0] = y.astype(o_ref.dtype)


def basic_conv3d(x_ncdhw, w_oidhw, *, negative_slope=NEG_SLOPE):
    """x_ncdhw: (N, Cin, D, H, W) f32; w_oidhw: (Cout, Cin, KD, KH, KW) f32.
    Returns (N, Cout, Do, Ho, Wo) f32 (stride 1, no padding), i.e. the
    BasicConv3d forward pass (conv3d bias=False + leaky_relu)."""
    N, Cin, D, H, W = x_ncdhw.shape
    Cout, _, KD, KH, KW = w_oidhw.shape
    Do, Ho, Wo = D - KD + 1, H - KH + 1, W - KW + 1
    L = D * H * W
    K = KD * KH * KW * Cin

    # Wrapper-side layout glue only (no compute):
    #   * flatten spatial (contiguous reshape, no transpose of x needed),
    #   * flatten weight to (Cout, K) in (a, b, c, cin) tap order,
    #   * cast both to bf16 for the MXU (accumulation stays f32 in-kernel).
    x_flat = x_ncdhw.reshape(N, Cin, L).astype(jnp.bfloat16)
    w_flat = jnp.transpose(w_oidhw, (0, 2, 3, 4, 1)).reshape(Cout, K).astype(jnp.bfloat16)

    kernel = functools.partial(
        _basic_conv3d_kernel,
        kd=KD, kh=KH, kw=KW, hw=H * W, wdim=W, neg_slope=negative_slope)

    out_flat = pl.pallas_call(
        kernel,
        out_shape=jax.ShapeDtypeStruct((N, Cout, L), jnp.float32),
        grid_spec=pltpu.PrefetchScalarGridSpec(
            num_scalar_prefetch=0,
            grid=(N,),
            in_specs=[
                pl.BlockSpec((1, Cin, L), lambda n: (n, 0, 0)),
                pl.BlockSpec((Cout, K), lambda n: (0, 0)),
            ],
            out_specs=pl.BlockSpec((1, Cout, L), lambda n: (n, 0, 0)),
        ),
        compiler_params=pltpu.CompilerParams(
            dimension_semantics=("parallel",)),
    )(x_flat, w_flat)

    # Crop the valid conv window out of the full lane-dense slab (layout glue).
    return out_flat.reshape(N, Cout, D, H, W)[:, :, :Do, :Ho, :Wo]


if __name__ == "__main__":
    # Small shapes consistent with BasicConv3d: batch=2, Cin=4, Cout=8,
    # depth=8, spatial=16x16, kernel_size=3.
    N, Cin, D, H, W = 2, 4, 8, 16, 16
    Cout, Ksz = 8, 3

    key = jax.random.PRNGKey(0)
    kx, kw = jax.random.split(key)
    # PyTorch-convention tensors (deterministic init, no checkpoint load).
    x_ncdhw = jax.random.normal(kx, (N, Cin, D, H, W), dtype=jnp.float32)
    w_oidhw = jax.random.normal(kw, (Cout, Cin, Ksz, Ksz, Ksz), dtype=jnp.float32) * 0.1

    out = basic_conv3d(x_ncdhw, w_oidhw)
    out = jax.block_until_ready(out)

    # Reference: same bf16-rounded inputs, f32 conv + leaky_relu (PyTorch
    # NCDHW/OIDHW semantics), so the comparison is apples-to-apples with the
    # in-kernel bf16 MXU / f32-accumulation path.
    x_ref_in = x_ncdhw.astype(jnp.bfloat16).astype(jnp.float32)
    w_ref_in = w_oidhw.astype(jnp.bfloat16).astype(jnp.float32)
    ref = lax.conv_general_dilated(
        x_ref_in, w_ref_in, window_strides=(1, 1, 1), padding="VALID",
        dimension_numbers=("NCDHW", "OIDHW", "NCDHW"),
        preferred_element_type=jnp.float32)
    ref = jnp.where(ref > 0, ref, NEG_SLOPE * ref)

    assert out.shape == ref.shape, (out.shape, ref.shape)
    np.testing.assert_allclose(np.asarray(out), np.asarray(ref),
                               rtol=1e-4, atol=1e-4)
    print("KERNEL_OK")
</pallas_src>

<mosaic_0001>
module attributes {stable_mosaic.version = 11 : i64} {
  func.func @_basic_conv3d_kernel(%arg0: i32, %arg1: memref<1x4x2048xbf16, #tpu.memory_space<vmem>>, %arg2: memref<8x108xbf16, #tpu.memory_space<vmem>>, %arg3: memref<1x8x2048xf32, #tpu.memory_space<vmem>>) attributes {dimension_semantics = [#tpu.dimension_semantics<parallel>], iteration_bounds = array<i64: 2>, scalar_prefetch = 0 : i64, scratch_operands = 0 : i64, tpu.core_type = #tpu.core_type<tc>, window_params = [{transform_indices = @transform_0, window_bounds = array<i64: 1, 4, 2048>}, {pipeline_mode = #tpu.pipeline_mode<synchronous>, transform_indices = @transform_1, window_bounds = array<i64: 8, 108>}, {transform_indices = @transform_2, window_bounds = array<i64: 1, 8, 2048>}]} {
    %c0 = arith.constant 0 : index
    %c0_0 = arith.constant 0 : index
    %c0_1 = arith.constant 0 : index
    %0 = vector.load %arg1[%c0, %c0_0, %c0_1] : memref<1x4x2048xbf16, #tpu.memory_space<vmem>>, vector<1x4x2048xbf16>
    %1 = vector.shape_cast %0 : vector<1x4x2048xbf16> to vector<4x2048xbf16>
    %c0_2 = arith.constant 0 : index
    %c0_3 = arith.constant 0 : index
    %2 = vector.load %arg2[%c0_2, %c0_3] : memref<8x108xbf16, #tpu.memory_space<vmem>>, vector<8x108xbf16>
    %3 = vector.extract_strided_slice %1 {offsets = [0, 1], sizes = [4, 2047], strides = [1, 1]} : vector<4x2048xbf16> to vector<4x2047xbf16>
    %4 = vector.extract_strided_slice %1 {offsets = [0, 0], sizes = [4, 1], strides = [1, 1]} : vector<4x2048xbf16> to vector<4x1xbf16>
    %5 = tpu.concatenate %3, %4 in 1 : vector<4x2047xbf16>, vector<4x1xbf16> -> vector<4x2048xbf16>
    %6 = vector.extract_strided_slice %1 {offsets = [0, 2], sizes = [4, 2046], strides = [1, 1]} : vector<4x2048xbf16> to vector<4x2046xbf16>
    %7 = vector.extract_strided_slice %1 {offsets = [0, 0], sizes = [4, 2], strides = [1, 1]} : vector<4x2048xbf16> to vector<4x2xbf16>
    %8 = tpu.concatenate %6, %7 in 1 : vector<4x2046xbf16>, vector<4x2xbf16> -> vector<4x2048xbf16>
    %9 = vector.extract_strided_slice %1 {offsets = [0, 16], sizes = [4, 2032], strides = [1, 1]} : vector<4x2048xbf16> to vector<4x2032xbf16>
    %10 = vector.extract_strided_slice %1 {offsets = [0, 0], sizes = [4, 16], strides = [1, 1]} : vector<4x2048xbf16> to vector<4x16xbf16>
    %11 = tpu.concatenate %9, %10 in 1 : vector<4x2032xbf16>, vector<4x16xbf16> -> vector<4x2048xbf16>
    %12 = vector.extract_strided_slice %1 {offsets = [0, 17], sizes = [4, 2031], strides = [1, 1]} : vector<4x2048xbf16> to vector<4x2031xbf16>
    %13 = vector.extract_strided_slice %1 {offsets = [0, 0], sizes = [4, 17], strides = [1, 1]} : vector<4x2048xbf16> to vector<4x17xbf16>
    %14 = tpu.concatenate %12, %13 in 1 : vector<4x2031xbf16>, vector<4x17xbf16> -> vector<4x2048xbf16>
    %15 = vector.extract_strided_slice %1 {offsets = [0, 18], sizes = [4, 2030], strides = [1, 1]} : vector<4x2048xbf16> to vector<4x2030xbf16>
    %16 = vector.extract_strided_slice %1 {offsets = [0, 0], sizes = [4, 18], strides = [1, 1]} : vector<4x2048xbf16> to vector<4x18xbf16>
    %17 = tpu.concatenate %15, %16 in 1 : vector<4x2030xbf16>, vector<4x18xbf16> -> vector<4x2048xbf16>
    %18 = vector.extract_strided_slice %1 {offsets = [0, 32], sizes = [4, 2016], strides = [1, 1]} : vector<4x2048xbf16> to vector<4x2016xbf16>
    %19 = vector.extract_strided_slice %1 {offsets = [0, 0], sizes = [4, 32], strides = [1, 1]} : vector<4x2048xbf16> to vector<4x32xbf16>
    %20 = tpu.concatenate %18, %19 in 1 : vector<4x2016xbf16>, vector<4x32xbf16> -> vector<4x2048xbf16>
    %21 = vector.extract_strided_slice %1 {offsets = [0, 33], sizes = [4, 2015], strides = [1, 1]} : vector<4x2048xbf16> to vector<4x2015xbf16>
    %22 = vector.extract_strided_slice %1 {offsets = [0, 0], sizes = [4, 33], strides = [1, 1]} : vector<4x2048xbf16> to vector<4x33xbf16>
    %23 = tpu.concatenate %21, %22 in 1 : vector<4x2015xbf16>, vector<4x33xbf16> -> vector<4x2048xbf16>
    %24 = vector.extract_strided_slice %1 {offsets = [0, 34], sizes = [4, 2014], strides = [1, 1]} : vector<4x2048xbf16> to vector<4x2014xbf16>
    %25 = vector.extract_strided_slice %1 {offsets = [0, 0], sizes = [4, 34], strides = [1, 1]} : vector<4x2048xbf16> to vector<4x34xbf16>
    %26 = tpu.concatenate %24, %25 in 1 : vector<4x2014xbf16>, vector<4x34xbf16> -> vector<4x2048xbf16>
    %27 = vector.extract_strided_slice %1 {offsets = [0, 256], sizes = [4, 1792], strides = [1, 1]} : vector<4x2048xbf16> to vector<4x1792xbf16>
    %28 = vector.extract_strided_slice %1 {offsets = [0, 0], sizes = [4, 256], strides = [1, 1]} : vector<4x2048xbf16> to vector<4x256xbf16>
    %29 = tpu.concatenate %27, %28 in 1 : vector<4x1792xbf16>, vector<4x256xbf16> -> vector<4x2048xbf16>
    %30 = vector.extract_strided_slice %1 {offsets = [0, 257], sizes = [4, 1791], strides = [1, 1]} : vector<4x2048xbf16> to vector<4x1791xbf16>
    %31 = vector.extract_strided_slice %1 {offsets = [0, 0], sizes = [4, 257], strides = [1, 1]} : vector<4x2048xbf16> to vector<4x257xbf16>
    %32 = tpu.concatenate %30, %31 in 1 : vector<4x1791xbf16>, vector<4x257xbf16> -> vector<4x2048xbf16>
    %33 = vector.extract_strided_slice %1 {offsets = [0, 258], sizes = [4, 1790], strides = [1, 1]} : vector<4x2048xbf16> to vector<4x1790xbf16>
    %34 = vector.extract_strided_slice %1 {offsets = [0, 0], sizes = [4, 258], strides = [1, 1]} : vector<4x2048xbf16> to vector<4x258xbf16>
    %35 = tpu.concatenate %33, %34 in 1 : vector<4x1790xbf16>, vector<4x258xbf16> -> vector<4x2048xbf16>
    %36 = vector.extract_strided_slice %1 {offsets = [0, 272], sizes = [4, 1776], strides = [1, 1]} : vector<4x2048xbf16> to vector<4x1776xbf16>
    %37 = vector.extract_strided_slice %1 {offsets = [0, 0], sizes = [4, 272], strides = [1, 1]} : vector<4x2048xbf16> to vector<4x272xbf16>
    %38 = tpu.concatenate %36, %37 in 1 : vector<4x1776xbf16>, vector<4x272xbf16> -> vector<4x2048xbf16>
    %39 = vector.extract_strided_slice %1 {offsets = [0, 273], sizes = [4, 1775], strides = [1, 1]} : vector<4x2048xbf16> to vector<4x1775xbf16>
    %40 = vector.extract_strided_slice %1 {offsets = [0, 0], sizes = [4, 273], strides = [1, 1]} : vector<4x2048xbf16> to vector<4x273xbf16>
    %41 = tpu.concatenate %39, %40 in 1 : vector<4x1775xbf16>, vector<4x273xbf16> -> vector<4x2048xbf16>
    %42 = vector.extract_strided_slice %1 {offsets = [0, 274], sizes = [4, 1774], strides = [1, 1]} : vector<4x2048xbf16> to vector<4x1774xbf16>
    %43 = vector.extract_strided_slice %1 {offsets = [0, 0], sizes = [4, 274], strides = [1, 1]} : vector<4x2048xbf16> to vector<4x274xbf16>
    %44 = tpu.concatenate %42, %43 in 1 : vector<4x1774xbf16>, vector<4x274xbf16> -> vector<4x2048xbf16>
    %45 = vector.extract_strided_slice %1 {offsets = [0, 288], sizes = [4, 1760], strides = [1, 1]} : vector<4x2048xbf16> to vector<4x1760xbf16>
    %46 = vector.extract_strided_slice %1 {offsets = [0, 0], sizes = [4, 288], strides = [1, 1]} : vector<4x2048xbf16> to vector<4x288xbf16>
    %47 = tpu.concatenate %45, %46 in 1 : vector<4x1760xbf16>, vector<4x288xbf16> -> vector<4x2048xbf16>
    %48 = vector.extract_strided_slice %1 {offsets = [0, 289], sizes = [4, 1759], strides = [1, 1]} : vector<4x2048xbf16> to vector<4x1759xbf16>
    %49 = vector.extract_strided_slice %1 {offsets = [0, 0], sizes = [4, 289], strides = [1, 1]} : vector<4x2048xbf16> to vector<4x289xbf16>
    %50 = tpu.concatenate %48, %49 in 1 : vector<4x1759xbf16>, vector<4x289xbf16> -> vector<4x2048xbf16>
    %51 = vector.extract_strided_slice %1 {offsets = [0, 290], sizes = [4, 1758], strides = [1, 1]} : vector<4x2048xbf16> to vector<4x1758xbf16>
    %52 = vector.extract_strided_slice %1 {offsets = [0, 0], sizes = [4, 290], strides = [1, 1]} : vector<4x2048xbf16> to vector<4x290xbf16>
    %53 = tpu.concatenate %51, %52 in 1 : vector<4x1758xbf16>, vector<4x290xbf16> -> vector<4x2048xbf16>
    %54 = vector.extract_strided_slice %1 {offsets = [0, 512], sizes = [4, 1536], strides = [1, 1]} : vector<4x2048xbf16> to vector<4x1536xbf16>
    %55 = vector.extract_strided_slice %1 {offsets = [0, 0], sizes = [4, 512], strides = [1, 1]} : vector<4x2048xbf16> to vector<4x512xbf16>
    %56 = tpu.concatenate %54, %55 in 1 : vector<4x1536xbf16>, vector<4x512xbf16> -> vector<4x2048xbf16>
    %57 = vector.extract_strided_slice %1 {offsets = [0, 513], sizes = [4, 1535], strides = [1, 1]} : vector<4x2048xbf16> to vector<4x1535xbf16>
    %58 = vector.extract_strided_slice %1 {offsets = [0, 0], sizes = [4, 513], strides = [1, 1]} : vector<4x2048xbf16> to vector<4x513xbf16>
    %59 = tpu.concatenate %57, %58 in 1 : vector<4x1535xbf16>, vector<4x513xbf16> -> vector<4x2048xbf16>
    %60 = vector.extract_strided_slice %1 {offsets = [0, 514], sizes = [4, 1534], strides = [1, 1]} : vector<4x2048xbf16> to vector<4x1534xbf16>
    %61 = vector.extract_strided_slice %1 {offsets = [0, 0], sizes = [4, 514], strides = [1, 1]} : vector<4x2048xbf16> to vector<4x514xbf16>
    %62 = tpu.concatenate %60, %61 in 1 : vector<4x1534xbf16>, vector<4x514xbf16> -> vector<4x2048xbf16>
    %63 = vector.extract_strided_slice %1 {offsets = [0, 528], sizes = [4, 1520], strides = [1, 1]} : vector<4x2048xbf16> to vector<4x1520xbf16>
    %64 = vector.extract_strided_slice %1 {offsets = [0, 0], sizes = [4, 528], strides = [1, 1]} : vector<4x2048xbf16> to vector<4x528xbf16>
    %65 = tpu.concatenate %63, %64 in 1 : vector<4x1520xbf16>, vector<4x528xbf16> -> vector<4x2048xbf16>
    %66 = vector.extract_strided_slice %1 {offsets = [0, 529], sizes = [4, 1519], strides = [1, 1]} : vector<4x2048xbf16> to vector<4x1519xbf16>
    %67 = vector.extract_strided_slice %1 {offsets = [0, 0], sizes = [4, 529], strides = [1, 1]} : vector<4x2048xbf16> to vector<4x529xbf16>
    %68 = tpu.concatenate %66, %67 in 1 : vector<4x1519xbf16>, vector<4x529xbf16> -> vector<4x2048xbf16>
    %69 = vector.extract_strided_slice %1 {offsets = [0, 530], sizes = [4, 1518], strides = [1, 1]} : vector<4x2048xbf16> to vector<4x1518xbf16>
    %70 = vector.extract_strided_slice %1 {offsets = [0, 0], sizes = [4, 530], strides = [1, 1]} : vector<4x2048xbf16> to vector<4x530xbf16>
    %71 = tpu.concatenate %69, %70 in 1 : vector<4x1518xbf16>, vector<4x530xbf16> -> vector<4x2048xbf16>
    %72 = vector.extract_strided_slice %1 {offsets = [0, 544], sizes = [4, 1504], strides = [1, 1]} : vector<4x2048xbf16> to vector<4x1504xbf16>
    %73 = vector.extract_strided_slice %1 {offsets = [0, 0], sizes = [4, 544], strides = [1, 1]} : vector<4x2048xbf16> to vector<4x544xbf16>
    %74 = tpu.concatenate %72, %73 in 1 : vector<4x1504xbf16>, vector<4x544xbf16> -> vector<4x2048xbf16>
    %75 = vector.extract_strided_slice %1 {offsets = [0, 545], sizes = [4, 1503], strides = [1, 1]} : vector<4x2048xbf16> to vector<4x1503xbf16>
    %76 = vector.extract_strided_slice %1 {offsets = [0, 0], sizes = [4, 545], strides = [1, 1]} : vector<4x2048xbf16> to vector<4x545xbf16>
    %77 = tpu.concatenate %75, %76 in 1 : vector<4x1503xbf16>, vector<4x545xbf16> -> vector<4x2048xbf16>
    %78 = vector.extract_strided_slice %1 {offsets = [0, 546], sizes = [4, 1502], strides = [1, 1]} : vector<4x2048xbf16> to vector<4x1502xbf16>
    %79 = vector.extract_strided_slice %1 {offsets = [0, 0], sizes = [4, 546], strides = [1, 1]} : vector<4x2048xbf16> to vector<4x546xbf16>
    %80 = tpu.concatenate %78, %79 in 1 : vector<4x1502xbf16>, vector<4x546xbf16> -> vector<4x2048xbf16>
    %81 = tpu.concatenate %1, %5, %8, %11, %14, %17, %20, %23, %26, %29, %32, %35, %38, %41, %44, %47 in 0 : vector<4x2048xbf16>, vector<4x2048xbf16>, vector<4x2048xbf16>, vector<4x2048xbf16>, vector<4x2048xbf16>, vector<4x2048xbf16>, vector<4x2048xbf16>, vector<4x2048xbf16>, vector<4x2048xbf16>, vector<4x2048xbf16>, vector<4x2048xbf16>, vector<4x2048xbf16>, vector<4x2048xbf16>, vector<4x2048xbf16>, vector<4x2048xbf16>, vector<4x2048xbf16> -> vector<64x2048xbf16>
    %82 = tpu.concatenate %50, %53, %56, %59, %62, %65, %68, %71, %74, %77, %80 in 0 : vector<4x2048xbf16>, vector<4x2048xbf16>, vector<4x2048xbf16>, vector<4x2048xbf16>, vector<4x2048xbf16>, vector<4x2048xbf16>, vector<4x2048xbf16>, vector<4x2048xbf16>, vector<4x2048xbf16>, vector<4x2048xbf16>, vector<4x2048xbf16> -> vector<44x2048xbf16>
    %83 = tpu.concatenate %81, %82 in 0 : vector<64x2048xbf16>, vector<44x2048xbf16> -> vector<108x2048xbf16>
    %cst = arith.constant dense<0.000000e+00> : vector<8x2048xf32>
    %84 = tpu.matmul %2, %83, %cst {dimension_numbers = #tpu.dot_dimension_numbers<[1], [0], [0], [1], [0, 0, 1, 1], [], []>} : vector<8x108xbf16>, vector<108x2048xbf16>, vector<8x2048xf32> -> vector<8x2048xf32>
    %cst_4 = arith.constant 0.000000e+00 : f32
    %85 = vector.broadcast %cst_4 : f32 to vector<8x2048xf32>
    %86 = arith.cmpf ogt, %84, %85 : vector<8x2048xf32>
    %cst_5 = arith.constant 0.00999999977 : f32
    %87 = vector.broadcast %cst_5 : f32 to vector<8x2048xf32>
    %88 = arith.mulf %87, %84 : vector<8x2048xf32>
    %89 = arith.select %86, %84, %88 : vector<8x2048xi1>, vector<8x2048xf32>
    %c0_6 = arith.constant 0 : index
    %c0_7 = arith.constant 0 : index
    %c0_8 = arith.constant 0 : index
    %90 = vector.load %arg3[%c0_6, %c0_7, %c0_8] : memref<1x8x2048xf32, #tpu.memory_space<vmem>>, vector<1x8x2048xf32>
    %91 = vector.shape_cast %90 : vector<1x8x2048xf32> to vector<8x2048xf32>
    %92 = vector.shape_cast %89 : vector<8x2048xf32> to vector<1x8x2048xf32>
    tpu.vector_store %arg3[%c0_6, %c0_7, %c0_8], %92 {strides = array<i32>} : memref<1x8x2048xf32, #tpu.memory_space<vmem>>, vector<1x8x2048xf32>,
    return
  }
  func.func @transform_0(%arg0: i32) -> (i32, i32, i32) {
    %c0_i32 = arith.constant 0 : i32
    %c0_i32_0 = arith.constant 0 : i32
    %c0_i32_1 = arith.constant 0 : i32
    return %arg0, %c0_i32, %c0_i32_0 : i32, i32, i32
  }
  func.func @transform_1(%arg0: i32) -> (i32, i32) {
    %c0_i32 = arith.constant 0 : i32
    %c0_i32_0 = arith.constant 0 : i32
    %c0_i32_1 = arith.constant 0 : i32
    return %c0_i32, %c0_i32_0 : i32, i32
  }
  func.func @transform_2(%arg0: i32) -> (i32, i32, i32) {
    %c0_i32 = arith.constant 0 : i32
    %c0_i32_0 = arith.constant 0 : i32
    %c0_i32_1 = arith.constant 0 : i32
    return %arg0, %c0_i32, %c0_i32_0 : i32, i32, i32
  }
}

</mosaic_0001>

<llo_original>
// kernel: tpu_custom_call.1
$region0: #{tpu_custom_call.1}
  #allocation0 [shape = 'u32[]', space=smem, size = 0x4, offset = 0x4, fixed_abs, tag = 'smem constant byte address 0x4 - core index']
  #allocation1 [shape = 'u32[144,128]{1,0:T(1,128)}', space=vmem, size = 0x12000, scoped, tag = 'internal scratch']
  %s0 = inlined_call_operand.hbm [shape: bf16[2,4,2048], index: 0, kind: input, shape index: {}]
  %s1 = inlined_call_operand.hbm [shape: bf16[8,108], index: 1, kind: input, shape index: {}]
  %s2 = inlined_call_operand.hbm [shape: f32[2,8,2048], index: 2, kind: output, shape index: {}]
  %s3 = sld [smem:[#allocation0]]
  $region49: #{tpu_custom_call.1} parent=0
    _
  %s5 = ssub.s32 1, %s3
  %s6 = scalar_select 0, %s5, %s3
  $region1: #{tpu_custom_call.1} parent=0
    #allocation2 [shape = 'u8[32768]{0}', space=vmem, size = 0x8000, scoped, tag = 'input window, operand 0']
    #allocation3 [shape = 's32[2]{0}', space=sflag, size = 0x8, scoped, tag = 'scoped memory for tpu_custom_call.1']
    #allocation4 [shape = 's32[2]{0}', space=sflag, size = 0x8, scoped, tag = 'scoped memory for tpu_custom_call.1']
    #allocation5 [shape = 'u8[2048]{0}', space=vmem, size = 0x800, scoped, tag = 'input window, operand 1, single buffered']
    #allocation6 [shape = 's32[1]{0}', space=sflag, size = 0x4, scoped, tag = 'scoped memory for tpu_custom_call.1']
    #allocation7 [shape = 'u8[131072]{0}', space=vmem, size = 0x20000, scoped, tag = 'output window, operand 0']
    %7 = vsyncpa [#allocation3], 0
    %s8 = scalar_lea.sflag [#allocation3], 1
    %9 = vsyncpa %s8, 0
    %10 = vsyncpa [#allocation6], 0
    %11 = vsyncpa [#allocation4], 0
    %s12 = scalar_lea.sflag [#allocation4], 1
    %13 = vsyncpa %s12, 0
    loop: start=0, step=1, limit=4
    $region2: #{tpu_custom_call.1} parent=1 // loop_pre_header
      _
    $region3: #{tpu_custom_call.1} parent=1 // loop_header
      %s15 = sphi 0, %s19
      %p16 = scmp.ge.s32.totalorder %s15, 4
      %s25 = sphi 0, %s27
      %s28 = sphi 0, %s25
      %s29 = sphi 0, %s28
      %s45 = sphi 0, %s29
      %s49 = sphi 0, %s49
      %s51 = sphi 0, %s49
      %s52 = sphi 0, %s51
      %s66 = sphi 0, %s52
      %s72 = sphi 0, %s74
      %s75 = sphi 0, %s72
      %s76 = sphi 0, %s75
      %s92 = sphi 0, %s76
    $region4: #{tpu_custom_call.1} parent=1 // loop_header_branch
      %18 = sbr.rel (%p16) target = $region8
    $region5: #{tpu_custom_call.1} parent=1 // loop_body
      %s20 = ssub.s32 %s15, 1
      %s21 = ssub.s32 %s15, 2
      %s22 = sadd.s32 %s15, 1
      %s23 = ssub.s32 %s15, %s22
      %p24 = scmp.eq.s32.totalorder %s23, 0
      %s26 = sadd.s32 %s25, 1
      %s27 = scalar_select %p24, %s25, %s26
      %p30 = pneg %p24
      %p31 = scmp.eq.s32.totalorder %s15, 1
      %p32 = por %p30, %p31
      %p33 = scmp.ne.s32.totalorder %s25, %s28
      %p34 = scmp.eq.s32.totalorder %s15, 0
      %p35 = por %p33, %p34
      %p36 = scmp.ne.s32.totalorder %s25, %s28
      %p37 = scmp.eq.s32.totalorder %s20, 1
      %p38 = por %p36, %p37
      %p39 = scmp.ne.s32.totalorder %s28, %s29
      %p40 = scmp.eq.s32.totalorder %s20, 0
      %p41 = por %p39, %p40
      %p42 = scmp.ne.s32.totalorder %s28, %s29
      %p43 = scmp.eq.s32.totalorder %s21, 1
      %p44 = por %p42, %p43
      %p46 = scmp.ne.s32.totalorder %s29, %s45
      %p47 = scmp.eq.s32.totalorder %s21, 0
      %p48 = por %p46, %p47
      %s50 = sadd.s32 %s49, 1
      %p53 = scmp.eq.s32.totalorder %s15, 1
      %p54 = scmp.ne.s32.totalorder %s49, %s51
      %p55 = scmp.eq.s32.totalorder %s15, 0
      %p56 = por %p54, %p55
      %p57 = scmp.ne.s32.totalorder %s49, %s51
      %p58 = scmp.eq.s32.totalorder %s20, 1
      %p59 = por %p57, %p58
      %p60 = scmp.ne.s32.totalorder %s51, %s52
      %p61 = scmp.eq.s32.totalorder %s20, 0
      %p62 = por %p60, %p61
      %p63 = scmp.ne.s32.totalorder %s51, %s52
      %p64 = scmp.eq.s32.totalorder %s21, 1
      %p65 = por %p63, %p64
      %p67 = scmp.ne.s32.totalorder %s52, %s66
      %p68 = scmp.eq.s32.totalorder %s21, 0
      %p69 = por %p67, %p68
      %s70 = ssub.s32 %s15, %s22
      %p71 = scmp.eq.s32.totalorder %s70, 0
      %s73 = sadd.s32 %s72, 1
      %s74 = scalar_select %p71, %s72, %s73
      %p77 = pneg %p71
      %p78 = scmp.eq.s32.totalorder %s15, 1
      %p79 = por %p77, %p78
      %p80 = scmp.ne.s32.totalorder %s72, %s75
      %p81 = scmp.eq.s32.totalorder %s15, 0
      %p82 = por %p80, %p81
      %p83 = scmp.ne.s32.totalorder %s72, %s75
      %p84 = scmp.eq.s32.totalorder %s20, 1
      %p85 = por %p83, %p84
      %p86 = scmp.ne.s32.totalorder %s75, %s76
      %p87 = scmp.eq.s32.totalorder %s20, 0
      %p88 = por %p86, %p87
      %p89 = scmp.ne.s32.totalorder %s75, %s76
      %p90 = scmp.eq.s32.totalorder %s21, 1
      %p91 = por %p89, %p90
      %p93 = scmp.ne.s32.totalorder %s76, %s92
      %p94 = scmp.eq.s32.totalorder %s21, 0
      %p95 = por %p93, %p94
      %p96 = scmp.le.s32.totalorder 1, %s15
      %p97 = scmp.lt.s32.totalorder %s15, 3
      %p98 = pnand %p96, %p97
      %p99 = pneg %p98
      // Predicated region
      $region9: #{tpu_custom_call.1} parent=5 // pred_check
        _
      $region10: #{tpu_custom_call.1} parent=5 // pred_check_branch
        %101 = sbr.rel (%p98) target = $region12
      $region11: #{tpu_custom_call.1} parent=5 // pred_region
        %s102 = ssub.s32 %s15, 1
        // Predicated region
        $region13: #{tpu_custom_call.1} parent=11 // pred_check
          %p103 = pneg %p62
        $region14: #{tpu_custom_call.1} parent=11 // pred_check_branch
          %105 = sbr.rel (%p103) target = $region16
        $region15: #{tpu_custom_call.1} parent=11 // pred_region
          %s107 = ssub.s32 64, 64
          %108 = vsyncadd [#allocation6], %s107
          %s110 = sshll.u32 [#allocation5], 4
          %s111 = int_to_ptr.vmem [resolvable:$true] %s110
          %113 = dma.hbm_to_vmem [thread:$0]  %s1, 64, %s111, [#allocation6]
        $region16: #{tpu_custom_call.1} parent=11 // pred_fallthru
          _
      $region12: #{tpu_custom_call.1} parent=5 // pred_fallthru
        _
      %p114 = scmp.lt.s32.totalorder %s15, 2
      // Predicated region
      $region17: #{tpu_custom_call.1} parent=5 // pred_check
        %p115 = pneg %p114
      $region18: #{tpu_custom_call.1} parent=5 // pred_check_branch
        %117 = sbr.rel (%p115) target = $region20
      $region19: #{tpu_custom_call.1} parent=5 // pred_region
        // Predicated region
        $region21: #{tpu_custom_call.1} parent=19 // pred_check
          %p118 = pneg %p35
        $region22: #{tpu_custom_call.1} parent=19 // pred_check_branch
          %120 = sbr.rel (%p118) target = $region24
        $region23: #{tpu_custom_call.1} parent=19 // pred_region
          %s121 = sand.u32 %s25, 1
          %s122 = scalar_lea.sflag [#allocation3], %s121
          %s123 = sand.u32 %s25, 1
          %s124 = smul.addr %s123, 32
          %s125 = scalar_lea.vmem [#allocation2], %s124
          %s127 = ssub.s32 512, 512
          %128 = vsyncadd %s122, %s127
          %s129 = smul.addr %s15, 16
          %s130 = smul.addr %s129, 32
          %s131 = scalar_lea.hbm %s0, %s130
          %s133 = sshll.u32 %s125, 4
          %s134 = int_to_ptr.vmem [resolvable:$true] %s133
          %136 = dma.hbm_to_vmem [thread:$0]  %s131, 512, %s134, %s122
        $region24: #{tpu_custom_call.1} parent=19 // pred_fallthru
          _
      $region20: #{tpu_custom_call.1} parent=5 // pred_fallthru
        _
      %p137 = scmp.le.s32.totalorder 1, %s15
      %p138 = scmp.lt.s32.totalorder %s15, 3
      %p139 = pnand %p137, %p138
      %p140 = pneg %p139
      // Predicated region
      $region25: #{tpu_custom_call.1} parent=5 // pred_check
        _
      $region26: #{tpu_custom_call.1} parent=5 // pred_check_branch
        %142 = sbr.rel (%p139) target = $region28
      $region27: #{tpu_custom_call.1} parent=5 // pred_region
        %s143 = ssub.s32 %s15, 1
        %s144 = sand.u32 %s28, 1
        %s145 = scalar_lea.sflag [#allocation3], %s144
        %s146 = sand.u32 %s28, 1
        %s147 = smul.addr %s146, 32
        %s148 = scalar_lea.vmem [#allocation2], %s147
        // Predicated region
        $region29: #{tpu_custom_call.1} parent=27 // pred_check
          %p149 = pneg %p41
        $region30: #{tpu_custom_call.1} parent=27 // pred_check_branch
          %151 = sbr.rel (%p149) target = $region32
        $region31: #{tpu_custom_call.1} parent=27 // pred_region
          %152 = dma.done %s145, 512
        $region32: #{tpu_custom_call.1} parent=27 // pred_fallthru
          _
        // Predicated region
        $region33: #{tpu_custom_call.1} parent=27 // pred_check
          %p153 = pneg %p62
        $region34: #{tpu_custom_call.1} parent=27 // pred_check_branch
          %155 = sbr.rel (%p153) target = $region36
        $region35: #{tpu_custom_call.1} parent=27 // pred_region
          %156 = dma.done [#allocation6], 64
        $region36: #{tpu_custom_call.1} parent=27 // pred_fallthru
          _
        %s157 = sand.u32 %s28, 1
        %s158 = scalar_lea.sflag [#allocation3], %s157
        %s159 = sand.u32 %s28, 1
        %s160 = smul.addr %s159, 32
        %s161 = scalar_lea.vmem [#allocation2], %s160
        %p162 = pneg %p41
        %p163 = pneg %p38
        %p164 = pneg %p62
        %p165 = pneg %p59
        %p166 = pneg %p88
        %p167 = pneg %p85
        %s168 = sand.u32 %s75, 1
        %s169 = scalar_lea.sflag [#allocation4], %s168
        %s170 = sand.u32 %s75, 1
        %s171 = smul.addr %s170, 128
        %s172 = scalar_lea.vmem [#allocation7], %s171
        %v174 = vld [vmem:[%s148] sm:$0xff]
        %v175 = vld [vmem:[%s148 + $0x8] sm:$0xff]
        %v176 = vld [vmem:[%s148 + $0x10] sm:$0xff]
        %v177 = vld [vmem:[%s148 + $0x18] sm:$0xff]
        %v178 = vld [vmem:[#allocation5] sm:$0xf]
        %v183 = vcombine.high %v174, %v174
        %v185 = vunpack.c.l.s4 1983009808
        %v186 = vunpack.c.0.s8 %v185
        %v187 = vlaneseq
        %v188 = vshrl.u32 %v187, 7
        %v189 = vsub.s32 %v186, %v188
        %v190 = vrot.slane %v174, %v189
        %v192 = vunpack.c.l.s4 1983009808
        %v193 = vunpack.c.0.s8 %v192
        %v194 = vlaneseq
        %v195 = vshrl.u32 %v194, 7
        %v196 = vsub.s32 %v193, %v195
        %v197 = vrot.slane %v183, %v196
        %v198 = vcombine.high %v190, %v190
        %v199 = vcombine.high %v197, %v197
        %v200 = vcombine.high %v175, %v175
        %v202 = vunpack.c.l.s4 1983009808
        %v203 = vunpack.c.0.s8 %v202
        %v204 = vlaneseq
        %v205 = vshrl.u32 %v204, 7
        %v206 = vsub.s32 %v203, %v205
        %v207 = vrot.slane %v175, %v206
        %v209 = vunpack.c.l.s4 1983009808
        %v210 = vunpack.c.0.s8 %v209
        %v211 = vlaneseq
        %v212 = vshrl.u32 %v211, 7
        %v213 = vsub.s32 %v210, %v212
        %v214 = vrot.slane %v200, %v213
        %v215 = vcombine.high %v207, %v207
        %v216 = vcombine.high %v214, %v214
        %v217 = vcombine.high %v176, %v176
        %v219 = vunpack.c.l.s4 1983009808
        %v220 = vunpack.c.0.s8 %v219
        %v221 = vlaneseq
        %v222 = vshrl.u32 %v221, 7
        %v223 = vsub.s32 %v220, %v222
        %v224 = vrot.slane %v176, %v223
        %v226 = vunpack.c.l.s4 1983009808
        %v227 = vunpack.c.0.s8 %v226
        %v228 = vlaneseq
        %v229 = vshrl.u32 %v228, 7
        %v230 = vsub.s32 %v227, %v229
        %v231 = vrot.slane %v217, %v230
        %v232 = vcombine.high %v224, %v224
        %v233 = vcombine.high %v231, %v231
        %v234 = vcombine.high %v177, %v177
        %v236 = vunpack.c.l.s4 1983009808
        %v237 = vunpack.c.0.s8 %v236
        %v238 = vlaneseq
        %v239 = vshrl.u32 %v238, 7
        %v240 = vsub.s32 %v237, %v239
        %v241 = vrot.slane %v177, %v240
        %v243 = vunpack.c.l.s4 1983009808
        %v244 = vunpack.c.0.s8 %v243
        %v245 = vlaneseq
        %v246 = vshrl.u32 %v245, 7
        %v247 = vsub.s32 %v244, %v246
        %v248 = vrot.slane %v234, %v247
        %v249 = vcombine.high %v241, %v241
        %v250 = vcombine.high %v248, %v248
        %251 = vrot.lane.b32.xlu0 %v190, 127
        %v252 = vpop.permute.xlu0 %251
        %253 = vrot.lane.b32.xlu0 %v198, 127
        %v254 = vpop.permute.xlu0 %253
        %255 = vrot.lane.b32.xlu0 %v197, 127
        %v256 = vpop.permute.xlu0 %255
        %257 = vrot.lane.b32.xlu0 %v199, 127
        %v258 = vpop.permute.xlu0 %257
        %259 = vrot.lane.b32.xlu0 %v207, 127
        %v260 = vpop.permute.xlu0 %259
        %261 = vrot.lane.b32.xlu0 %v215, 127
        %v262 = vpop.permute.xlu0 %261
        %263 = vrot.lane.b32.xlu0 %v214, 127
        %v264 = vpop.permute.xlu0 %263
        %265 = vrot.lane.b32.xlu0 %v216, 127
        %v266 = vpop.permute.xlu0 %265
        %267 = vrot.lane.b32.xlu0 %v224, 127
        %v268 = vpop.permute.xlu0 %267
        %269 = vrot.lane.b32.xlu0 %v232, 127
        %v270 = vpop.permute.xlu0 %269
        %271 = vrot.lane.b32.xlu0 %v231, 127
        %v272 = vpop.permute.xlu0 %271
        %273 = vrot.lane.b32.xlu0 %v233, 127
        %v274 = vpop.permute.xlu0 %273
        %275 = vrot.lane.b32.xlu0 %v241, 127
        %v276 = vpop.permute.xlu0 %275
        %277 = vrot.lane.b32.xlu0 %v249, 127
        %v278 = vpop.permute.xlu0 %277
        %279 = vrot.lane.b32.xlu0 %v248, 127
        %v280 = vpop.permute.xlu0 %279
        %281 = vrot.lane.b32.xlu0 %v250, 127
        %v282 = vpop.permute.xlu0 %281
        %vm283 = vcmask 1039360
        %v284 = vsel %vm283, %v252, %v254
        %v285 = vsel %vm283, %v254, %v256
        %v286 = vsel %vm283, %v256, %v258
        %v287 = vsel %vm283, %v258, %v260
        %v288 = vsel %vm283, %v260, %v262
        %v289 = vsel %vm283, %v262, %v264
        %v290 = vsel %vm283, %v264, %v266
        %v291 = vsel %vm283, %v266, %v268
        %v292 = vsel %vm283, %v268, %v270
        %v293 = vsel %vm283, %v270, %v272
        %v294 = vsel %vm283, %v272, %v274
        %v295 = vsel %vm283, %v274, %v276
        %v296 = vsel %vm283, %v276, %v278
        %v297 = vsel %vm283, %v278, %v280
        %v298 = vsel %vm283, %v280, %v282
        %vm299 = vcmask 1039360
        %v302 = vsel %vm299, %v282, %v252
        %303 = vrot.lane.b32.xlu0 %v190, 126
        %v304 = vpop.permute.xlu0 %303
        %305 = vrot.lane.b32.xlu0 %v198, 126
        %v306 = vpop.permute.xlu0 %305
        %307 = vrot.lane.b32.xlu0 %v197, 126
        %v308 = vpop.permute.xlu0 %307
        %309 = vrot.lane.b32.xlu0 %v199, 126
        %v310 = vpop.permute.xlu0 %309
        %311 = vrot.lane.b32.xlu0 %v207, 126
        %v312 = vpop.permute.xlu0 %311
        %313 = vrot.lane.b32.xlu0 %v215, 126
        %v314 = vpop.permute.xlu0 %313
        %315 = vrot.lane.b32.xlu0 %v214, 126
        %v316 = vpop.permute.xlu0 %315
        %317 = vrot.lane.b32.xlu0 %v216, 126
        %v318 = vpop.permute.xlu0 %317
        %319 = vrot.lane.b32.xlu0 %v224, 126
        %v320 = vpop.permute.xlu0 %319
        %321 = vrot.lane.b32.xlu0 %v232, 126
        %v322 = vpop.permute.xlu0 %321
        %323 = vrot.lane.b32.xlu0 %v231, 126
        %v324 = vpop.permute.xlu0 %323
        %325 = vrot.lane.b32.xlu0 %v233, 126
        %v326 = vpop.permute.xlu0 %325
        %327 = vrot.lane.b32.xlu0 %v241, 126
        %v328 = vpop.permute.xlu0 %327
        %329 = vrot.lane.b32.xlu0 %v249, 126
        %v330 = vpop.permute.xlu0 %329
        %331 = vrot.lane.b32.xlu0 %v248, 126
        %v332 = vpop.permute.xlu0 %331
        %333 = vrot.lane.b32.xlu0 %v250, 126
        %v334 = vpop.permute.xlu0 %333
        %vm335 = vcmask 1031168
        %v336 = vsel %vm335, %v304, %v306
        %v337 = vsel %vm335, %v306, %v308
        %v338 = vsel %vm335, %v308, %v310
        %v339 = vsel %vm335, %v310, %v312
        %v340 = vsel %vm335, %v312, %v314
        %v341 = vsel %vm335, %v314, %v316
        %v342 = vsel %vm335, %v316, %v318
        %v343 = vsel %vm335, %v318, %v320
        %v344 = vsel %vm335, %v320, %v322
        %v345 = vsel %vm335, %v322, %v324
        %v346 = vsel %vm335, %v324, %v326
        %v347 = vsel %vm335, %v326, %v328
        %v348 = vsel %vm335, %v328, %v330
        %v349 = vsel %vm335, %v330, %v332
        %v350 = vsel %vm335, %v332, %v334
        %vm351 = vcmask 1031168
        %v354 = vsel %vm351, %v334, %v304
        %355 = vrot.lane.b32.xlu0 %v190, 112
        %v356 = vpop.permute.xlu0 %355
        %357 = vrot.lane.b32.xlu0 %v198, 112
        %v358 = vpop.permute.xlu0 %357
        %359 = vrot.lane.b32.xlu0 %v197, 112
        %v360 = vpop.permute.xlu0 %359
        %361 = vrot.lane.b32.xlu0 %v199, 112
        %v362 = vpop.permute.xlu0 %361
        %363 = vrot.lane.b32.xlu0 %v207, 112
        %v364 = vpop.permute.xlu0 %363
        %365 = vrot.lane.b32.xlu0 %v215, 112
        %v366 = vpop.permute.xlu0 %365
        %367 = vrot.lane.b32.xlu0 %v214, 112
        %v368 = vpop.permute.xlu0 %367
        %369 = vrot.lane.b32.xlu0 %v216, 112
        %v370 = vpop.permute.xlu0 %369
        %371 = vrot.lane.b32.xlu0 %v224, 112
        %v372 = vpop.permute.xlu0 %371
        %373 = vrot.lane.b32.xlu0 %v232, 112
        %v374 = vpop.permute.xlu0 %373
        %375 = vrot.lane.b32.xlu0 %v231, 112
        %v376 = vpop.permute.xlu0 %375
        %377 = vrot.lane.b32.xlu0 %v233, 112
        %v378 = vpop.permute.xlu0 %377
        %379 = vrot.lane.b32.xlu0 %v241, 112
        %v380 = vpop.permute.xlu0 %379
        %381 = vrot.lane.b32.xlu0 %v249, 112
        %v382 = vpop.permute.xlu0 %381
        %383 = vrot.lane.b32.xlu0 %v248, 112
        %v384 = vpop.permute.xlu0 %383
        %385 = vrot.lane.b32.xlu0 %v250, 112
        %v386 = vpop.permute.xlu0 %385
        %vm387 = vcmask 916480
        %v388 = vsel %vm387, %v356, %v358
        %v389 = vsel %vm387, %v358, %v360
        %v390 = vsel %vm387, %v360, %v362
        %v391 = vsel %vm387, %v362, %v364
        %v392 = vsel %vm387, %v364, %v366
        %v393 = vsel %vm387, %v366, %v368
        %v394 = vsel %vm387, %v368, %v370
        %v395 = vsel %vm387, %v370, %v372
        %v396 = vsel %vm387, %v372, %v374
        %v397 = vsel %vm387, %v374, %v376
        %v398 = vsel %vm387, %v376, %v378
        %v399 = vsel %vm387, %v378, %v380
        %v400 = vsel %vm387, %v380, %v382
        %v401 = vsel %vm387, %v382, %v384
        %v402 = vsel %vm387, %v384, %v386
        %vm403 = vcmask 916480
        %v406 = vsel %vm403, %v386, %v356
        %407 = vrot.lane.b32.xlu0 %v190, 111
        %v408 = vpop.permute.xlu0 %407
        %409 = vrot.lane.b32.xlu0 %v198, 111
        %v410 = vpop.permute.xlu0 %409
        %411 = vrot.lane.b32.xlu0 %v197, 111
        %v412 = vpop.permute.xlu0 %411
        %413 = vrot.lane.b32.xlu0 %v199, 111
        %v414 = vpop.permute.xlu0 %413
        %415 = vrot.lane.b32.xlu0 %v207, 111
        %v416 = vpop.permute.xlu0 %415
        %417 = vrot.lane.b32.xlu0 %v215, 111
        %v418 = vpop.permute.xlu0 %417
        %419 = vrot.lane.b32.xlu0 %v214, 111
        %v420 = vpop.permute.xlu0 %419
        %421 = vrot.lane.b32.xlu0 %v216, 111
        %v422 = vpop.permute.xlu0 %421
        %423 = vrot.lane.b32.xlu0 %v224, 111
        %v424 = vpop.permute.xlu0 %423
        %425 = vrot.lane.b32.xlu0 %v232, 111
        %v426 = vpop.permute.xlu0 %425
        %427 = vrot.lane.b32.xlu0 %v231, 111
        %v428 = vpop.permute.xlu0 %427
        %429 = vrot.lane.b32.xlu0 %v233, 111
        %v430 = vpop.permute.xlu0 %429
        %431 = vrot.lane.b32.xlu0 %v241, 111
        %v432 = vpop.permute.xlu0 %431
        %433 = vrot.lane.b32.xlu0 %v249, 111
        %v434 = vpop.permute.xlu0 %433
        %435 = vrot.lane.b32.xlu0 %v248, 111
        %v436 = vpop.permute.xlu0 %435
        %437 = vrot.lane.b32.xlu0 %v250, 111
        %v438 = vpop.permute.xlu0 %437
        %vm439 = vcmask 908288
        %v440 = vsel %vm439, %v408, %v410
        %v441 = vsel %vm439, %v410, %v412
        %v442 = vsel %vm439, %v412, %v414
        %v443 = vsel %vm439, %v414, %v416
        %v444 = vsel %vm439, %v416, %v418
        %v445 = vsel %vm439, %v418, %v420
        %v446 = vsel %vm439, %v420, %v422
        %v447 = vsel %vm439, %v422, %v424
        %v448 = vsel %vm439, %v424, %v426
        %v449 = vsel %vm439, %v426, %v428
        %v450 = vsel %vm439, %v428, %v430
        %v451 = vsel %vm439, %v430, %v432
        %v452 = vsel %vm439, %v432, %v434
        %v453 = vsel %vm439, %v434, %v436
        %v454 = vsel %vm439, %v436, %v438
        %vm455 = vcmask 908288
        %v458 = vsel %vm455, %v438, %v408
        %459 = vrot.lane.b32.xlu0 %v190, 110
        %v460 = vpop.permute.xlu0 %459
        %461 = vrot.lane.b32.xlu0 %v198, 110
        %v462 = vpop.permute.xlu0 %461
        %463 = vrot.lane.b32.xlu0 %v197, 110
        %v464 = vpop.permute.xlu0 %463
        %465 = vrot.lane.b32.xlu0 %v199, 110
        %v466 = vpop.permute.xlu0 %465
        %467 = vrot.lane.b32.xlu0 %v207, 110
        %v468 = vpop.permute.xlu0 %467
        %469 = vrot.lane.b32.xlu0 %v215, 110
        %v470 = vpop.permute.xlu0 %469
        %471 = vrot.lane.b32.xlu0 %v214, 110
        %v472 = vpop.permute.xlu0 %471
        %473 = vrot.lane.b32.xlu0 %v216, 110
        %v474 = vpop.permute.xlu0 %473
        %475 = vrot.lane.b32.xlu0 %v224, 110
        %v476 = vpop.permute.xlu0 %475
        %477 = vrot.lane.b32.xlu0 %v232, 110
        %v478 = vpop.permute.xlu0 %477
        %479 = vrot.lane.b32.xlu0 %v231, 110
        %v480 = vpop.permute.xlu0 %479
        %481 = vrot.lane.b32.xlu0 %v233, 110
        %v482 = vpop.permute.xlu0 %481
        %483 = vrot.lane.b32.xlu0 %v241, 110
        %v484 = vpop.permute.xlu0 %483
        %485 = vrot.lane.b32.xlu0 %v249, 110
        %v486 = vpop.permute.xlu0 %485
        %487 = vrot.lane.b32.xlu0 %v248, 110
        %v488 = vpop.permute.xlu0 %487
        %489 = vrot.lane.b32.xlu0 %v250, 110
        %v490 = vpop.permute.xlu0 %489
        %vm491 = vcmask 900096
        %v492 = vsel %vm491, %v460, %v462
        %v493 = vsel %vm491, %v462, %v464
        %v494 = vsel %vm491, %v464, %v466
        %v495 = vsel %vm491, %v466, %v468
        %v496 = vsel %vm491, %v468, %v470
        %v497 = vsel %vm491, %v470, %v472
        %v498 = vsel %vm491, %v472, %v474
        %v499 = vsel %vm491, %v474, %v476
        %v500 = vsel %vm491, %v476, %v478
        %v501 = vsel %vm491, %v478, %v480
        %v502 = vsel %vm491, %v480, %v482
        %v503 = vsel %vm491, %v482, %v484
        %v504 = vsel %vm491, %v484, %v486
        %v505 = vsel %vm491, %v486, %v488
        %v506 = vsel %vm491, %v488, %v490
        %vm507 = vcmask 900096
        %v510 = vsel %vm507, %v490, %v460
        %511 = vrot.lane.b32.xlu0 %v190, 96
        %v512 = vpop.permute.xlu0 %511
        %513 = vrot.lane.b32.xlu0 %v198, 96
        %v514 = vpop.permute.xlu0 %513
        %515 = vrot.lane.b32.xlu0 %v197, 96
        %v516 = vpop.permute.xlu0 %515
        %517 = vrot.lane.b32.xlu0 %v199, 96
        %v518 = vpop.permute.xlu0 %517
        %519 = vrot.lane.b32.xlu0 %v207, 96
        %v520 = vpop.permute.xlu0 %519
        %521 = vrot.lane.b32.xlu0 %v215, 96
        %v522 = vpop.permute.xlu0 %521
        %523 = vrot.lane.b32.xlu0 %v214, 96
        %v524 = vpop.permute.xlu0 %523
        %525 = vrot.lane.b32.xlu0 %v216, 96
        %v526 = vpop.permute.xlu0 %525
        %527 = vrot.lane.b32.xlu0 %v224, 96
        %v528 = vpop.permute.xlu0 %527
        %529 = vrot.lane.b32.xlu0 %v232, 96
        %v530 = vpop.permute.xlu0 %529
        %531 = vrot.lane.b32.xlu0 %v231, 96
        %v532 = vpop.permute.xlu0 %531
        %533 = vrot.lane.b32.xlu0 %v233, 96
        %v534 = vpop.permute.xlu0 %533
        %535 = vrot.lane.b32.xlu0 %v241, 96
        %v536 = vpop.permute.xlu0 %535
        %537 = vrot.lane.b32.xlu0 %v249, 96
        %v538 = vpop.permute.xlu0 %537
        %539 = vrot.lane.b32.xlu0 %v248, 96
        %v540 = vpop.permute.xlu0 %539
        %541 = vrot.lane.b32.xlu0 %v250, 96
        %v542 = vpop.permute.xlu0 %541
        %vm543 = vcmask 785408
        %v544 = vsel %vm543, %v512, %v514
        %v545 = vsel %vm543, %v514, %v516
        %v546 = vsel %vm543, %v516, %v518
        %v547 = vsel %vm543, %v518, %v520
        %v548 = vsel %vm543, %v520, %v522
        %v549 = vsel %vm543, %v522, %v524
        %v550 = vsel %vm543, %v524, %v526
        %v551 = vsel %vm543, %v526, %v528
        %v552 = vsel %vm543, %v528, %v530
        %v553 = vsel %vm543, %v530, %v532
        %v554 = vsel %vm543, %v532, %v534
        %v555 = vsel %vm543, %v534, %v536
        %v556 = vsel %vm543, %v536, %v538
        %v557 = vsel %vm543, %v538, %v540
        %v558 = vsel %vm543, %v540, %v542
        %vm559 = vcmask 785408
        %v562 = vsel %vm559, %v542, %v512
        %563 = vrot.lane.b32.xlu0 %v190, 95
        %v564 = vpop.permute.xlu0 %563
        %565 = vrot.lane.b32.xlu0 %v198, 95
        %v566 = vpop.permute.xlu0 %565
        %567 = vrot.lane.b32.xlu0 %v197, 95
        %v568 = vpop.permute.xlu0 %567
        %569 = vrot.lane.b32.xlu0 %v199, 95
        %v570 = vpop.permute.xlu0 %569
        %571 = vrot.lane.b32.xlu0 %v207, 95
        %v572 = vpop.permute.xlu0 %571
        %573 = vrot.lane.b32.xlu0 %v215, 95
        %v574 = vpop.permute.xlu0 %573
        %575 = vrot.lane.b32.xlu0 %v214, 95
        %v576 = vpop.permute.xlu0 %575
        %577 = vrot.lane.b32.xlu0 %v216, 95
        %v578 = vpop.permute.xlu0 %577
        %579 = vrot.lane.b32.xlu0 %v224, 95
        %v580 = vpop.permute.xlu0 %579
        %581 = vrot.lane.b32.xlu0 %v232, 95
        %v582 = vpop.permute.xlu0 %581
        %583 = vrot.lane.b32.xlu0 %v231, 95
        %v584 = vpop.permute.xlu0 %583
        %585 = vrot.lane.b32.xlu0 %v233, 95
        %v586 = vpop.permute.xlu0 %585
        %587 = vrot.lane.b32.xlu0 %v241, 95
        %v588 = vpop.permute.xlu0 %587
        %589 = vrot.lane.b32.xlu0 %v249, 95
        %v590 = vpop.permute.xlu0 %589
        %591 = vrot.lane.b32.xlu0 %v248, 95
        %v592 = vpop.permute.xlu0 %591
        %593 = vrot.lane.b32.xlu0 %v250, 95
        %v594 = vpop.permute.xlu0 %593
        %vm595 = vcmask 777216
        %v596 = vsel %vm595, %v564, %v566
        %v597 = vsel %vm595, %v566, %v568
        %v598 = vsel %vm595, %v568, %v570
        %v599 = vsel %vm595, %v570, %v572
        %v600 = vsel %vm595, %v572, %v574
        %v601 = vsel %vm595, %v574, %v576
        %v602 = vsel %vm595, %v576, %v578
        %v603 = vsel %vm595, %v578, %v580
        %v604 = vsel %vm595, %v580, %v582
        %v605 = vsel %vm595, %v582, %v584
        %v606 = vsel %vm595, %v584, %v586
        %v607 = vsel %vm595, %v586, %v588
        %v608 = vsel %vm595, %v588, %v590
        %v609 = vsel %vm595, %v590, %v592
        %v610 = vsel %vm595, %v592, %v594
        %vm611 = vcmask 777216
        %v614 = vsel %vm611, %v594, %v564
        %615 = vrot.lane.b32.xlu0 %v190, 94
        %v616 = vpop.permute.xlu0 %615
        %617 = vrot.lane.b32.xlu0 %v198, 94
        %v618 = vpop.permute.xlu0 %617
        %619 = vrot.lane.b32.xlu0 %v197, 94
        %v620 = vpop.permute.xlu0 %619
        %621 = vrot.lane.b32.xlu0 %v199, 94
        %v622 = vpop.permute.xlu0 %621
        %623 = vrot.lane.b32.xlu0 %v207, 94
        %v624 = vpop.permute.xlu0 %623
        %625 = vrot.lane.b32.xlu0 %v215, 94
        %v626 = vpop.permute.xlu0 %625
        %627 = vrot.lane.b32.xlu0 %v214, 94
        %v628 = vpop.permute.xlu0 %627
        %629 = vrot.lane.b32.xlu0 %v216, 94
        %v630 = vpop.permute.xlu0 %629
        %631 = vrot.lane.b32.xlu0 %v224, 94
        %v632 = vpop.permute.xlu0 %631
        %633 = vrot.lane.b32.xlu0 %v232, 94
        %v634 = vpop.permute.xlu0 %633
        %635 = vrot.lane.b32.xlu0 %v231, 94
        %v636 = vpop.permute.xlu0 %635
        %637 = vrot.lane.b32.xlu0 %v233, 94
        %v638 = vpop.permute.xlu0 %637
        %639 = vrot.lane.b32.xlu0 %v241, 94
        %v640 = vpop.permute.xlu0 %639
        %641 = vrot.lane.b32.xlu0 %v249, 94
        %v642 = vpop.permute.xlu0 %641
        %643 = vrot.lane.b32.xlu0 %v248, 94
        %v644 = vpop.permute.xlu0 %643
        %645 = vrot.lane.b32.xlu0 %v250, 94
        %v646 = vpop.permute.xlu0 %645
        %vm647 = vcmask 769024
        %v648 = vsel %vm647, %v616, %v618
        %v649 = vsel %vm647, %v618, %v620
        %v650 = vsel %vm647, %v620, %v622
        %v651 = vsel %vm647, %v622, %v624
        %v652 = vsel %vm647, %v624, %v626
        %v653 = vsel %vm647, %v626, %v628
        %v654 = vsel %vm647, %v628, %v630
        %v655 = vsel %vm647, %v630, %v632
        %v656 = vsel %vm647, %v632, %v634
        %v657 = vsel %vm647, %v634, %v636
        %v658 = vsel %vm647, %v636, %v638
        %v659 = vsel %vm647, %v638, %v640
        %v660 = vsel %vm647, %v640, %v642
        %v661 = vsel %vm647, %v642, %v644
        %v662 = vsel %vm647, %v644, %v646
        %vm663 = vcmask 769024
        %v666 = vsel %vm663, %v646, %v616
        %v668 = vrot.slane %v284, 6
        %v669 = vrot.slane %v285, 6
        %v670 = vrot.slane %v286, 6
        %v671 = vrot.slane %v287, 6
        %v672 = vrot.slane %v288, 6
        %v673 = vrot.slane %v289, 6
        %v674 = vrot.slane %v290, 6
        %v675 = vrot.slane %v291, 6
        %v676 = vrot.slane %v292, 6
        %v677 = vrot.slane %v293, 6
        %v678 = vrot.slane %v294, 6
        %v679 = vrot.slane %v295, 6
        %v680 = vrot.slane %v296, 6
        %v681 = vrot.slane %v297, 6
        %v682 = vrot.slane %v298, 6
        %v683 = vrot.slane %v302, 6
        %v685 = vrot.slane %v336, 4
        %v686 = vrot.slane %v337, 4
        %v687 = vrot.slane %v338, 4
        %v688 = vrot.slane %v339, 4
        %v689 = vrot.slane %v340, 4
        %v690 = vrot.slane %v341, 4
        %v691 = vrot.slane %v342, 4
        %v692 = vrot.slane %v343, 4
        %v693 = vrot.slane %v344, 4
        %v694 = vrot.slane %v345, 4
        %v695 = vrot.slane %v346, 4
        %v696 = vrot.slane %v347, 4
        %v697 = vrot.slane %v348, 4
        %v698 = vrot.slane %v349, 4
        %v699 = vrot.slane %v350, 4
        %v700 = vrot.slane %v354, 4
        %v702 = vrot.slane %v388, 2
        %v703 = vrot.slane %v389, 2
        %v704 = vrot.slane %v390, 2
        %v705 = vrot.slane %v391, 2
        %v706 = vrot.slane %v392, 2
        %v707 = vrot.slane %v393, 2
        %v708 = vrot.slane %v394, 2
        %v709 = vrot.slane %v395, 2
        %v710 = vrot.slane %v396, 2
        %v711 = vrot.slane %v397, 2
        %v712 = vrot.slane %v398, 2
        %v713 = vrot.slane %v399, 2
        %v714 = vrot.slane %v400, 2
        %v715 = vrot.slane %v401, 2
        %v716 = vrot.slane %v402, 2
        %v717 = vrot.slane %v406, 2
        %v719 = vrot.slane %v492, 6
        %v720 = vrot.slane %v493, 6
        %v721 = vrot.slane %v494, 6
        %v722 = vrot.slane %v495, 6
        %v723 = vrot.slane %v496, 6
        %v724 = vrot.slane %v497, 6
        %v725 = vrot.slane %v498, 6
        %v726 = vrot.slane %v499, 6
        %v727 = vrot.slane %v500, 6
        %v728 = vrot.slane %v501, 6
        %v729 = vrot.slane %v502, 6
        %v730 = vrot.slane %v503, 6
        %v731 = vrot.slane %v504, 6
        %v732 = vrot.slane %v505, 6
        %v733 = vrot.slane %v506, 6
        %v734 = vrot.slane %v510, 6
        %v736 = vrot.slane %v544, 4
        %v737 = vrot.slane %v545, 4
        %v738 = vrot.slane %v546, 4
        %v739 = vrot.slane %v547, 4
        %v740 = vrot.slane %v548, 4
        %v741 = vrot.slane %v549, 4
        %v742 = vrot.slane %v550, 4
        %v743 = vrot.slane %v551, 4
        %v744 = vrot.slane %v552, 4
        %v745 = vrot.slane %v553, 4
        %v746 = vrot.slane %v554, 4
        %v747 = vrot.slane %v555, 4
        %v748 = vrot.slane %v556, 4
        %v749 = vrot.slane %v557, 4
        %v750 = vrot.slane %v558, 4
        %v751 = vrot.slane %v562, 4
        %v753 = vrot.slane %v596, 2
        %v754 = vrot.slane %v597, 2
        %v755 = vrot.slane %v598, 2
        %v756 = vrot.slane %v599, 2
        %v757 = vrot.slane %v600, 2
        %v758 = vrot.slane %v601, 2
        %v759 = vrot.slane %v602, 2
        %v760 = vrot.slane %v603, 2
        %v761 = vrot.slane %v604, 2
        %v762 = vrot.slane %v605, 2
        %v763 = vrot.slane %v606, 2
        %v764 = vrot.slane %v607, 2
        %v765 = vrot.slane %v608, 2
        %v766 = vrot.slane %v609, 2
        %v767 = vrot.slane %v610, 2
        %v768 = vrot.slane %v614, 2
        %v769 = vrot.slane %v197, 6
        %v770 = vrot.slane %v199, 6
        %v771 = vrot.slane %v207, 6
        %v772 = vrot.slane %v215, 6
        %v773 = vrot.slane %v214, 6
        %v774 = vrot.slane %v216, 6
        %v775 = vrot.slane %v224, 6
        %v776 = vrot.slane %v232, 6
        %v777 = vrot.slane %v231, 6
        %v778 = vrot.slane %v233, 6
        %v779 = vrot.slane %v241, 6
        %v780 = vrot.slane %v249, 6
        %v781 = vrot.slane %v248, 6
        %v782 = vrot.slane %v250, 6
        %v783 = vrot.slane %v190, 6
        %v784 = vrot.slane %v198, 6
        %v785 = vrot.slane %v286, 4
        %v786 = vrot.slane %v287, 4
        %v787 = vrot.slane %v288, 4
        %v788 = vrot.slane %v289, 4
        %v789 = vrot.slane %v290, 4
        %v790 = vrot.slane %v291, 4
        %v791 = vrot.slane %v292, 4
        %v792 = vrot.slane %v293, 4
        %v793 = vrot.slane %v294, 4
        %v794 = vrot.slane %v295, 4
        %v795 = vrot.slane %v296, 4
        %v796 = vrot.slane %v297, 4
        %v797 = vrot.slane %v298, 4
        %v798 = vrot.slane %v302, 4
        %v799 = vrot.slane %v284, 4
        %v800 = vrot.slane %v285, 4
        %v801 = vrot.slane %v338, 2
        %v802 = vrot.slane %v339, 2
        %v803 = vrot.slane %v340, 2
        %v804 = vrot.slane %v341, 2
        %v805 = vrot.slane %v342, 2
        %v806 = vrot.slane %v343, 2
        %v807 = vrot.slane %v344, 2
        %v808 = vrot.slane %v345, 2
        %v809 = vrot.slane %v346, 2
        %v810 = vrot.slane %v347, 2
        %v811 = vrot.slane %v348, 2
        %v812 = vrot.slane %v349, 2
        %v813 = vrot.slane %v350, 2
        %v814 = vrot.slane %v354, 2
        %v815 = vrot.slane %v336, 2
        %v816 = vrot.slane %v337, 2
        %v818 = vrot.slane %v442, 6
        %v819 = vrot.slane %v443, 6
        %v820 = vrot.slane %v444, 6
        %v821 = vrot.slane %v445, 6
        %v822 = vrot.slane %v446, 6
        %v823 = vrot.slane %v447, 6
        %v824 = vrot.slane %v448, 6
        %v825 = vrot.slane %v449, 6
        %v826 = vrot.slane %v450, 6
        %v827 = vrot.slane %v451, 6
        %v828 = vrot.slane %v452, 6
        %v829 = vrot.slane %v453, 6
        %v830 = vrot.slane %v454, 6
        %v831 = vrot.slane %v458, 6
        %v832 = vrot.slane %v440, 6
        %v833 = vrot.slane %v441, 6
        %v834 = vrot.slane %v494, 4
        %v835 = vrot.slane %v495, 4
        %v836 = vrot.slane %v496, 4
        %v837 = vrot.slane %v497, 4
        %v838 = vrot.slane %v498, 4
        %v839 = vrot.slane %v499, 4
        %v840 = vrot.slane %v500, 4
        %v841 = vrot.slane %v501, 4
        %v842 = vrot.slane %v502, 4
        %v843 = vrot.slane %v503, 4
        %v844 = vrot.slane %v504, 4
        %v845 = vrot.slane %v505, 4
        %v846 = vrot.slane %v506, 4
        %v847 = vrot.slane %v510, 4
        %v848 = vrot.slane %v492, 4
        %v849 = vrot.slane %v493, 4
        %v850 = vrot.slane %v546, 2
        %v851 = vrot.slane %v547, 2
        %v852 = vrot.slane %v548, 2
        %v853 = vrot.slane %v549, 2
        %v854 = vrot.slane %v550, 2
        %v855 = vrot.slane %v551, 2
        %v856 = vrot.slane %v552, 2
        %v857 = vrot.slane %v553, 2
        %v858 = vrot.slane %v554, 2
        %v859 = vrot.slane %v555, 2
        %v860 = vrot.slane %v556, 2
        %v861 = vrot.slane %v557, 2
        %v862 = vrot.slane %v558, 2
        %v863 = vrot.slane %v562, 2
        %v864 = vrot.slane %v544, 2
        %v865 = vrot.slane %v545, 2
        %vm866 = vcmask 1041408
        %v869 = vsel %vm866, %v190, %v668
        %v872 = vsel %vm866, %v198, %v669
        %v875 = vsel %vm866, %v197, %v670
        %v878 = vsel %vm866, %v199, %v671
        %v881 = vsel %vm866, %v207, %v672
        %v884 = vsel %vm866, %v215, %v673
        %v887 = vsel %vm866, %v214, %v674
        %v890 = vsel %vm866, %v216, %v675
        %v893 = vsel %vm866, %v224, %v676
        %v896 = vsel %vm866, %v232, %v677
        %v899 = vsel %vm866, %v231, %v678
        %v902 = vsel %vm866, %v233, %v679
        %v905 = vsel %vm866, %v241, %v680
        %v908 = vsel %vm866, %v249, %v681
        %v911 = vsel %vm866, %v248, %v682
        %v914 = vsel %vm866, %v250, %v683
        %vm915 = vcmask 1043456
        %v917 = vsel %vm915, %v869, %v685
        %v919 = vsel %vm915, %v872, %v686
        %v921 = vsel %vm915, %v875, %v687
        %v923 = vsel %vm915, %v878, %v688
        %v925 = vsel %vm915, %v881, %v689
        %v927 = vsel %vm915, %v884, %v690
        %v929 = vsel %vm915, %v887, %v691
        %v931 = vsel %vm915, %v890, %v692
        %v933 = vsel %vm915, %v893, %v693
        %v935 = vsel %vm915, %v896, %v694
        %v937 = vsel %vm915, %v899, %v695
        %v939 = vsel %vm915, %v902, %v696
        %v941 = vsel %vm915, %v905, %v697
        %v943 = vsel %vm915, %v908, %v698
        %v945 = vsel %vm915, %v911, %v699
        %v947 = vsel %vm915, %v914, %v700
        %vm948 = vcmask 1045504
        %v950 = vsel %vm948, %v917, %v702
        %v953 = vsel %vm948, %v919, %v703
        %v956 = vsel %vm948, %v921, %v704
        %v959 = vsel %vm948, %v923, %v705
        %v962 = vsel %vm948, %v925, %v706
        %v965 = vsel %vm948, %v927, %v707
        %v968 = vsel %vm948, %v929, %v708
        %v971 = vsel %vm948, %v931, %v709
        %v974 = vsel %vm948, %v933, %v710
        %v977 = vsel %vm948, %v935, %v711
        %v980 = vsel %vm948, %v937, %v712
        %v983 = vsel %vm948, %v939, %v713
        %v986 = vsel %vm948, %v941, %v714
        %v989 = vsel %vm948, %v943, %v715
        %v992 = vsel %vm948, %v945, %v716
        %v995 = vsel %vm948, %v947, %v717
        %v999 = vsel %vm866, %v440, %v719
        %v1002 = vsel %vm866, %v441, %v720
        %v1005 = vsel %vm866, %v442, %v721
        %v1008 = vsel %vm866, %v443, %v722
        %v1011 = vsel %vm866, %v444, %v723
        %v1014 = vsel %vm866, %v445, %v724
        %v1017 = vsel %vm866, %v446, %v725
        %v1020 = vsel %vm866, %v447, %v726
        %v1023 = vsel %vm866, %v448, %v727
        %v1026 = vsel %vm866, %v449, %v728
        %v1029 = vsel %vm866, %v450, %v729
        %v1032 = vsel %vm866, %v451, %v730
        %v1035 = vsel %vm866, %v452, %v731
        %v1038 = vsel %vm866, %v453, %v732
        %v1041 = vsel %vm866, %v454, %v733
        %v1043 = vsel %vm866, %v458, %v734
        %v1045 = vsel %vm915, %v999, %v736
        %v1047 = vsel %vm915, %v1002, %v737
        %v1049 = vsel %vm915, %v1005, %v738
        %v1051 = vsel %vm915, %v1008, %v739
        %v1053 = vsel %vm915, %v1011, %v740
        %v1055 = vsel %vm915, %v1014, %v741
        %v1057 = vsel %vm915, %v1017, %v742
        %v1059 = vsel %vm915, %v1020, %v743
        %v1061 = vsel %vm915, %v1023, %v744
        %v1063 = vsel %vm915, %v1026, %v745
        %v1065 = vsel %vm915, %v1029, %v746
        %v1067 = vsel %vm915, %v1032, %v747
        %v1069 = vsel %vm915, %v1035, %v748
        %v1071 = vsel %vm915, %v1038, %v749
        %v1073 = vsel %vm915, %v1041, %v750
        %v1075 = vsel %vm915, %v1043, %v751
        %v1077 = vsel %vm948, %v1045, %v753
        %v1080 = vsel %vm948, %v1047, %v754
        %v1083 = vsel %vm948, %v1049, %v755
        %v1086 = vsel %vm948, %v1051, %v756
        %v1089 = vsel %vm948, %v1053, %v757
        %v1092 = vsel %vm948, %v1055, %v758
        %v1095 = vsel %vm948, %v1057, %v759
        %v1098 = vsel %vm948, %v1059, %v760
        %v1101 = vsel %vm948, %v1061, %v761
        %v1104 = vsel %vm948, %v1063, %v762
        %v1107 = vsel %vm948, %v1065, %v763
        %v1110 = vsel %vm948, %v1067, %v764
        %v1113 = vsel %vm948, %v1069, %v765
        %v1116 = vsel %vm948, %v1071, %v766
        %v1119 = vsel %vm948, %v1073, %v767
        %v1122 = vsel %vm948, %v1075, %v768
        %v1126 = vsel %vm866, %v648, %v769
        %v1129 = vsel %vm866, %v649, %v770
        %v1132 = vsel %vm866, %v650, %v771
        %v1135 = vsel %vm866, %v651, %v772
        %v1138 = vsel %vm866, %v652, %v773
        %v1141 = vsel %vm866, %v653, %v774
        %v1144 = vsel %vm866, %v654, %v775
        %v1147 = vsel %vm866, %v655, %v776
        %v1150 = vsel %vm866, %v656, %v777
        %v1153 = vsel %vm866, %v657, %v778
        %v1156 = vsel %vm866, %v658, %v779
        %v1159 = vsel %vm866, %v659, %v780
        %v1162 = vsel %vm866, %v660, %v781
        %v1165 = vsel %vm866, %v661, %v782
        %v1168 = vsel %vm866, %v662, %v783
        %v1170 = vsel %vm866, %v666, %v784
        %v1172 = vsel %vm915, %v1126, %v785
        %v1174 = vsel %vm915, %v1129, %v786
        %v1176 = vsel %vm915, %v1132, %v787
        %v1178 = vsel %vm915, %v1135, %v788
        %v1180 = vsel %vm915, %v1138, %v789
        %v1182 = vsel %vm915, %v1141, %v790
        %v1184 = vsel %vm915, %v1144, %v791
        %v1186 = vsel %vm915, %v1147, %v792
        %v1188 = vsel %vm915, %v1150, %v793
        %v1190 = vsel %vm915, %v1153, %v794
        %v1192 = vsel %vm915, %v1156, %v795
        %v1194 = vsel %vm915, %v1159, %v796
        %v1196 = vsel %vm915, %v1162, %v797
        %v1198 = vsel %vm915, %v1165, %v798
        %v1200 = vsel %vm915, %v1168, %v799
        %v1202 = vsel %vm915, %v1170, %v800
        %v1204 = vsel %vm948, %v1172, %v801
        %v1207 = vsel %vm948, %v1174, %v802
        %v1210 = vsel %vm948, %v1176, %v803
        %v1213 = vsel %vm948, %v1178, %v804
        %v1216 = vsel %vm948, %v1180, %v805
        %v1219 = vsel %vm948, %v1182, %v806
        %v1222 = vsel %vm948, %v1184, %v807
        %v1225 = vsel %vm948, %v1186, %v808
        %v1228 = vsel %vm948, %v1188, %v809
        %v1231 = vsel %vm948, %v1190, %v810
        %v1234 = vsel %vm948, %v1192, %v811
        %v1237 = vsel %vm948, %v1194, %v812
        %v1240 = vsel %vm948, %v1196, %v813
        %v1243 = vsel %vm948, %v1198, %v814
        %v1246 = vsel %vm948, %v1200, %v815
        %v1249 = vsel %vm948, %v1202, %v816
        %v1253 = vsel %vm866, %v390, %v818
        %v1256 = vsel %vm866, %v391, %v819
        %v1259 = vsel %vm866, %v392, %v820
        %v1262 = vsel %vm866, %v393, %v821
        %v1265 = vsel %vm866, %v394, %v822
        %v1268 = vsel %vm866, %v395, %v823
        %v1271 = vsel %vm866, %v396, %v824
        %v1274 = vsel %vm866, %v397, %v825
        %v1277 = vsel %vm866, %v398, %v826
        %v1280 = vsel %vm866, %v399, %v827
        %v1283 = vsel %vm866, %v400, %v828
        %v1286 = vsel %vm866, %v401, %v829
        %v1289 = vsel %vm866, %v402, %v830
        %v1291 = vsel %vm866, %v406, %v831
        %v1294 = vsel %vm866, %v388, %v832
        %v1297 = vsel %vm866, %v389, %v833
        %v1299 = vsel %vm915, %v1253, %v834
        %v1301 = vsel %vm915, %v1256, %v835
        %v1303 = vsel %vm915, %v1259, %v836
        %v1305 = vsel %vm915, %v1262, %v837
        %v1307 = vsel %vm915, %v1265, %v838
        %v1309 = vsel %vm915, %v1268, %v839
        %v1311 = vsel %vm915, %v1271, %v840
        %v1313 = vsel %vm915, %v1274, %v841
        %v1315 = vsel %vm915, %v1277, %v842
        %v1317 = vsel %vm915, %v1280, %v843
        %v1319 = vsel %vm915, %v1283, %v844
        %v1321 = vsel %vm915, %v1286, %v845
        %v1323 = vsel %vm915, %v1289, %v846
        %v1325 = vsel %vm915, %v1291, %v847
        %v1327 = vsel %vm915, %v1294, %v848
        %v1329 = vsel %vm915, %v1297, %v849
        %v1331 = vsel %vm948, %v1299, %v850
        %v1334 = vsel %vm948, %v1301, %v851
        %v1337 = vsel %vm948, %v1303, %v852
        %v1340 = vsel %vm948, %v1305, %v853
        %v1343 = vsel %vm948, %v1307, %v854
        %v1346 = vsel %vm948, %v1309, %v855
        %v1349 = vsel %vm948, %v1311, %v856
        %v1352 = vsel %vm948, %v1313, %v857
        %v1355 = vsel %vm948, %v1315, %v858
        %v1358 = vsel %vm948, %v1317, %v859
        %v1361 = vsel %vm948, %v1319, %v860
        %v1364 = vsel %vm948, %v1321, %v861
        %v1367 = vsel %vm948, %v1323, %v862
        %v1370 = vsel %vm948, %v1325, %v863
        %v1373 = vsel %vm948, %v1327, %v864
        %v1376 = vsel %vm948, %v1329, %v865
        %v1379 = vrot.slane %v650, 6
        %v1380 = vrot.slane %v651, 6
        %v1381 = vrot.slane %v652, 6
        %v1382 = vrot.slane %v653, 6
        %v1383 = vrot.slane %v654, 6
        %v1384 = vrot.slane %v655, 6
        %v1385 = vrot.slane %v656, 6
        %v1386 = vrot.slane %v657, 6
        %v1387 = vrot.slane %v658, 6
        %v1388 = vrot.slane %v659, 6
        %v1389 = vrot.slane %v660, 6
        %v1390 = vrot.slane %v661, 6
        %v1391 = vrot.slane %v662, 6
        %v1392 = vrot.slane %v666, 6
        %v1393 = vrot.slane %v648, 6
        %v1394 = vrot.slane %v649, 6
        %v1395 = vrot.slane %v207, 4
        %v1396 = vrot.slane %v215, 4
        %v1397 = vrot.slane %v214, 4
        %v1398 = vrot.slane %v216, 4
        %v1399 = vrot.slane %v224, 4
        %v1400 = vrot.slane %v232, 4
        %v1401 = vrot.slane %v231, 4
        %v1402 = vrot.slane %v233, 4
        %v1403 = vrot.slane %v241, 4
        %v1404 = vrot.slane %v249, 4
        %v1405 = vrot.slane %v248, 4
        %v1406 = vrot.slane %v250, 4
        %v1407 = vrot.slane %v190, 4
        %v1408 = vrot.slane %v198, 4
        %v1409 = vrot.slane %v197, 4
        %v1410 = vrot.slane %v199, 4
        %v1411 = vrot.slane %v288, 2
        %v1412 = vrot.slane %v289, 2
        %v1413 = vrot.slane %v290, 2
        %v1414 = vrot.slane %v291, 2
        %v1415 = vrot.slane %v292, 2
        %v1416 = vrot.slane %v293, 2
        %v1417 = vrot.slane %v294, 2
        %v1418 = vrot.slane %v295, 2
        %v1419 = vrot.slane %v296, 2
        %v1420 = vrot.slane %v297, 2
        %v1421 = vrot.slane %v298, 2
        %v1422 = vrot.slane %v302, 2
        %v1423 = vrot.slane %v284, 2
        %v1424 = vrot.slane %v285, 2
        %v1425 = vrot.slane %v286, 2
        %v1426 = vrot.slane %v287, 2
        %v1427 = vrot.slane %v392, 6
        %v1428 = vrot.slane %v393, 6
        %v1429 = vrot.slane %v394, 6
        %v1430 = vrot.slane %v395, 6
        %v1431 = vrot.slane %v396, 6
        %v1432 = vrot.slane %v397, 6
        %v1433 = vrot.slane %v398, 6
        %v1434 = vrot.slane %v399, 6
        %v1435 = vrot.slane %v400, 6
        %v1436 = vrot.slane %v401, 6
        %v1437 = vrot.slane %v402, 6
        %v1438 = vrot.slane %v406, 6
        %v1439 = vrot.slane %v388, 6
        %v1440 = vrot.slane %v389, 6
        %v1441 = vrot.slane %v390, 6
        %v1442 = vrot.slane %v391, 6
        %v1443 = vrot.slane %v444, 4
        %v1444 = vrot.slane %v445, 4
        %v1445 = vrot.slane %v446, 4
        %v1446 = vrot.slane %v447, 4
        %v1447 = vrot.slane %v448, 4
        %v1448 = vrot.slane %v449, 4
        %v1449 = vrot.slane %v450, 4
        %v1450 = vrot.slane %v451, 4
        %v1451 = vrot.slane %v452, 4
        %v1452 = vrot.slane %v453, 4
        %v1453 = vrot.slane %v454, 4
        %v1454 = vrot.slane %v458, 4
        %v1455 = vrot.slane %v440, 4
        %v1456 = vrot.slane %v441, 4
        %v1457 = vrot.slane %v442, 4
        %v1458 = vrot.slane %v443, 4
        %v1459 = vrot.slane %v496, 2
        %v1460 = vrot.slane %v497, 2
        %v1461 = vrot.slane %v498, 2
        %v1462 = vrot.slane %v499, 2
        %v1463 = vrot.slane %v500, 2
        %v1464 = vrot.slane %v501, 2
        %v1465 = vrot.slane %v502, 2
        %v1466 = vrot.slane %v503, 2
        %v1467 = vrot.slane %v504, 2
        %v1468 = vrot.slane %v505, 2
        %v1469 = vrot.slane %v506, 2
        %v1470 = vrot.slane %v510, 2
        %v1471 = vrot.slane %v492, 2
        %v1472 = vrot.slane %v493, 2
        %v1473 = vrot.slane %v494, 2
        %v1474 = vrot.slane %v495, 2
        %v1475 = vrot.slane %v600, 6
        %v1476 = vrot.slane %v601, 6
        %v1477 = vrot.slane %v602, 6
        %v1478 = vrot.slane %v603, 6
        %v1479 = vrot.slane %v604, 6
        %v1480 = vrot.slane %v605, 6
        %v1481 = vrot.slane %v606, 6
        %v1482 = vrot.slane %v607, 6
        %v1483 = vrot.slane %v608, 6
        %v1484 = vrot.slane %v609, 6
        %v1485 = vrot.slane %v610, 6
        %v1486 = vrot.slane %v614, 6
        %v1487 = vrot.slane %v596, 6
        %v1488 = vrot.slane %v597, 6
        %v1489 = vrot.slane %v598, 6
        %v1490 = vrot.slane %v599, 6
        %v1491 = vrot.slane %v652, 4
        %v1492 = vrot.slane %v653, 4
        %v1493 = vrot.slane %v654, 4
        %v1494 = vrot.slane %v655, 4
        %v1495 = vrot.slane %v656, 4
        %v1496 = vrot.slane %v657, 4
        %v1497 = vrot.slane %v658, 4
        %v1498 = vrot.slane %v659, 4
        %v1499 = vrot.slane %v660, 4
        %v1500 = vrot.slane %v661, 4
        %v1501 = vrot.slane %v662, 4
        %v1502 = vrot.slane %v666, 4
        %v1503 = vrot.slane %v648, 4
        %v1504 = vrot.slane %v649, 4
        %v1505 = vrot.slane %v650, 4
        %v1506 = vrot.slane %v651, 4
        %v1509 = vsel %vm866, %v598, %v1379
        %v1512 = vsel %vm866, %v599, %v1380
        %v1515 = vsel %vm866, %v600, %v1381
        %v1518 = vsel %vm866, %v601, %v1382
        %v1521 = vsel %vm866, %v602, %v1383
        %v1524 = vsel %vm866, %v603, %v1384
        %v1527 = vsel %vm866, %v604, %v1385
        %v1530 = vsel %vm866, %v605, %v1386
        %v1533 = vsel %vm866, %v606, %v1387
        %v1536 = vsel %vm866, %v607, %v1388
        %v1539 = vsel %vm866, %v608, %v1389
        %v1542 = vsel %vm866, %v609, %v1390
        %v1545 = vsel %vm866, %v610, %v1391
        %v1547 = vsel %vm866, %v614, %v1392
        %v1550 = vsel %vm866, %v596, %v1393
        %v1553 = vsel %vm866, %v597, %v1394
        %v1555 = vsel %vm915, %v1509, %v1395
        %v1557 = vsel %vm915, %v1512, %v1396
        %v1559 = vsel %vm915, %v1515, %v1397
        %v1561 = vsel %vm915, %v1518, %v1398
        %v1563 = vsel %vm915, %v1521, %v1399
        %v1565 = vsel %vm915, %v1524, %v1400
        %v1567 = vsel %vm915, %v1527, %v1401
        %v1569 = vsel %vm915, %v1530, %v1402
        %v1571 = vsel %vm915, %v1533, %v1403
        %v1573 = vsel %vm915, %v1536, %v1404
        %v1575 = vsel %vm915, %v1539, %v1405
        %v1577 = vsel %vm915, %v1542, %v1406
        %v1579 = vsel %vm915, %v1545, %v1407
        %v1581 = vsel %vm915, %v1547, %v1408
        %v1583 = vsel %vm915, %v1550, %v1409
        %v1585 = vsel %vm915, %v1553, %v1410
        %v1587 = vsel %vm948, %v1555, %v1411
        %v1590 = vsel %vm948, %v1557, %v1412
        %v1593 = vsel %vm948, %v1559, %v1413
        %v1596 = vsel %vm948, %v1561, %v1414
        %v1599 = vsel %vm948, %v1563, %v1415
        %v1602 = vsel %vm948, %v1565, %v1416
        %v1605 = vsel %vm948, %v1567, %v1417
        %v1608 = vsel %vm948, %v1569, %v1418
        %v1611 = vsel %vm948, %v1571, %v1419
        %v1614 = vsel %vm948, %v1573, %v1420
        %v1617 = vsel %vm948, %v1575, %v1421
        %v1620 = vsel %vm948, %v1577, %v1422
        %v1623 = vsel %vm948, %v1579, %v1423
        %v1626 = vsel %vm948, %v1581, %v1424
        %v1629 = vsel %vm948, %v1583, %v1425
        %v1632 = vsel %vm948, %v1585, %v1426
        %v1636 = vsel %vm866, %v340, %v1427
        %v1639 = vsel %vm866, %v341, %v1428
        %v1642 = vsel %vm866, %v342, %v1429
        %v1645 = vsel %vm866, %v343, %v1430
        %v1648 = vsel %vm866, %v344, %v1431
        %v1651 = vsel %vm866, %v345, %v1432
        %v1654 = vsel %vm866, %v346, %v1433
        %v1657 = vsel %vm866, %v347, %v1434
        %v1660 = vsel %vm866, %v348, %v1435
        %v1663 = vsel %vm866, %v349, %v1436
        %v1666 = vsel %vm866, %v350, %v1437
        %v1668 = vsel %vm866, %v354, %v1438
        %v1671 = vsel %vm866, %v336, %v1439
        %v1674 = vsel %vm866, %v337, %v1440
        %v1677 = vsel %vm866, %v338, %v1441
        %v1680 = vsel %vm866, %v339, %v1442
        %v1682 = vsel %vm915, %v1636, %v1443
        %v1684 = vsel %vm915, %v1639, %v1444
        %v1686 = vsel %vm915, %v1642, %v1445
        %v1688 = vsel %vm915, %v1645, %v1446
        %v1690 = vsel %vm915, %v1648, %v1447
        %v1692 = vsel %vm915, %v1651, %v1448
        %v1694 = vsel %vm915, %v1654, %v1449
        %v1696 = vsel %vm915, %v1657, %v1450
        %v1698 = vsel %vm915, %v1660, %v1451
        %v1700 = vsel %vm915, %v1663, %v1452
        %v1702 = vsel %vm915, %v1666, %v1453
        %v1704 = vsel %vm915, %v1668, %v1454
        %v1706 = vsel %vm915, %v1671, %v1455
        %v1708 = vsel %vm915, %v1674, %v1456
        %v1710 = vsel %vm915, %v1677, %v1457
        %v1712 = vsel %vm915, %v1680, %v1458
        %v1714 = vsel %vm948, %v1682, %v1459
        %v1717 = vsel %vm948, %v1684, %v1460
        %v1720 = vsel %vm948, %v1686, %v1461
        %v1723 = vsel %vm948, %v1688, %v1462
        %v1726 = vsel %vm948, %v1690, %v1463
        %v1729 = vsel %vm948, %v1692, %v1464
        %v1732 = vsel %vm948, %v1694, %v1465
        %v1735 = vsel %vm948, %v1696, %v1466
        %v1738 = vsel %vm948, %v1698, %v1467
        %v1741 = vsel %vm948, %v1700, %v1468
        %v1744 = vsel %vm948, %v1702, %v1469
        %v1747 = vsel %vm948, %v1704, %v1470
        %v1750 = vsel %vm948, %v1706, %v1471
        %v1753 = vsel %vm948, %v1708, %v1472
        %v1756 = vsel %vm948, %v1710, %v1473
        %v1759 = vsel %vm948, %v1712, %v1474
        %v1763 = vsel %vm866, %v548, %v1475
        %v1766 = vsel %vm866, %v549, %v1476
        %v1769 = vsel %vm866, %v550, %v1477
        %v1772 = vsel %vm866, %v551, %v1478
        %v1775 = vsel %vm866, %v552, %v1479
        %v1778 = vsel %vm866, %v553, %v1480
        %v1781 = vsel %vm866, %v554, %v1481
        %v1784 = vsel %vm866, %v555, %v1482
        %v1787 = vsel %vm866, %v556, %v1483
        %v1790 = vsel %vm866, %v557, %v1484
        %v1793 = vsel %vm866, %v558, %v1485
        %v1795 = vsel %vm866, %v562, %v1486
        %v1798 = vsel %vm866, %v544, %v1487
        %v1801 = vsel %vm866, %v545, %v1488
        %v1804 = vsel %vm866, %v546, %v1489
        %v1807 = vsel %vm866, %v547, %v1490
        %v1809 = vsel %vm915, %v1763, %v1491
        %v1811 = vsel %vm915, %v1766, %v1492
        %v1813 = vsel %vm915, %v1769, %v1493
        %v1815 = vsel %vm915, %v1772, %v1494
        %v1817 = vsel %vm915, %v1775, %v1495
        %v1819 = vsel %vm915, %v1778, %v1496
        %v1821 = vsel %vm915, %v1781, %v1497
        %v1823 = vsel %vm915, %v1784, %v1498
        %v1825 = vsel %vm915, %v1787, %v1499
        %v1827 = vsel %vm915, %v1790, %v1500
        %v1829 = vsel %vm915, %v1793, %v1501
        %v1831 = vsel %vm915, %v1795, %v1502
        %v1833 = vsel %vm915, %v1798, %v1503
        %v1835 = vsel %vm915, %v1801, %v1504
        %v1837 = vsel %vm915, %v1804, %v1505
        %v1839 = vsel %vm915, %v1807, %v1506
        %vm1840 = vcmask 883712
        %v1842 = vsel %vm1840, %v178, 0
        %v1844 = vsel %vm948, %v1809, 0
        %v1846 = vsel %vm948, %v1811, 0
        %v1848 = vsel %vm948, %v1813, 0
        %v1850 = vsel %vm948, %v1815, 0
        %v1852 = vsel %vm948, %v1817, 0
        %v1854 = vsel %vm948, %v1819, 0
        %v1856 = vsel %vm948, %v1821, 0
        %v1858 = vsel %vm948, %v1823, 0
        %v1860 = vsel %vm948, %v1825, 0
        %v1862 = vsel %vm948, %v1827, 0
        %v1864 = vsel %vm948, %v1829, 0
        %v1866 = vsel %vm948, %v1831, 0
        %v1868 = vsel %vm948, %v1833, 0
        %v1870 = vsel %vm948, %v1835, 0
        %v1872 = vsel %vm948, %v1837, 0
        %v1874 = vsel %vm948, %v1839, 0
        %1876 = vmatprep.subr.bf16.mxu0 0
        %1877 = vmatpush1.bf16.msra.mxu0 0
        %1878 = vmatprep.subr.bf16.mxu0 %v1846
        %1879 = vmatpush1.bf16.msra.mxu0 %v1844
        %1880 = vmatprep.subr.bf16.mxu0 %v1717
        %1881 = vmatpush1.bf16.msra.mxu0 %v1714
        %1882 = vmatprep.subr.bf16.mxu0 %v1590
        %1883 = vmatpush1.bf16.msra.mxu0 %v1587
        %1884 = vmatprep.subr.bf16.mxu0 %v1334
        %1885 = vmatpush1.bf16.msra.mxu0 %v1331
        %1886 = vmatprep.subr.bf16.mxu0 %v1207
        %1887 = vmatpush1.bf16.msra.mxu0 %v1204
        %1888 = vmatprep.subr.bf16.mxu0 %v1080
        %1889 = vmatpush1.bf16.msra.mxu0 %v1077
        %1890 = vmatprep.subr.bf16.mxu0 %v953
        %1891 = vmatpush1.bf16.msra.mxu0 %v950
        %1892 = vmatprep.subr.bf16.mxu0 0
        %1893 = vmatpush2.bf16.msra.mxu0 0
        %1894 = vmatprep.subr.bf16.mxu0 0
        %1895 = vmatpush2.bf16.msra.mxu0 0
        %1896 = vmatprep.subr.bf16.mxu0 0
        %1897 = vmatpush2.bf16.msra.mxu0 0
        %1898 = vmatprep.subr.bf16.mxu0 0
        %1899 = vmatpush2.bf16.msra.mxu0 0
        %1900 = vmatprep.subr.bf16.mxu0 0
        %1901 = vmatpush2.bf16.msra.mxu0 0
        %1902 = vmatprep.subr.bf16.mxu0 0
        %1903 = vmatpush2.bf16.msra.mxu0 0
        %1904 = vmatprep.subr.bf16.mxu0 0
        %1905 = vmatpush2.bf16.msra.mxu0 0
        %1906 = vmatprep.subr.bf16.mxu0 0
        %1907 = vmatpush2.bf16.msra.mxu0 0
        %1908 = vmatprep.mubr.bf16.mxu0 0
        %1909 = vmatmul.mubr.bf16.gmra.mxu0 %v1842
        %v1910 = vpop.f32.mrf.mxu0
        %v1911 = vadd.f32 0.0, %v1910
        %v1912 = vpop.f32.mrf.mxu0
        %v1913 = vadd.f32 0.0, %v1912
        %v1914 = vpop.f32.mrf.mxu0
        %v1915 = vpop.f32.mrf.mxu0
        %1916 = vdwg.mxu0
        %1917 = vmatprep.subr.bf16.mxu0 0
        %1918 = vmatpush1.bf16.msra.mxu0 0
        %1919 = vmatprep.subr.bf16.mxu0 %v1850
        %1920 = vmatpush1.bf16.msra.mxu0 %v1848
        %1921 = vmatprep.subr.bf16.mxu0 %v1723
        %1922 = vmatpush1.bf16.msra.mxu0 %v1720
        %1923 = vmatprep.subr.bf16.mxu0 %v1596
        %1924 = vmatpush1.bf16.msra.mxu0 %v1593
        %1925 = vmatprep.subr.bf16.mxu0 %v1340
        %1926 = vmatpush1.bf16.msra.mxu0 %v1337
        %1927 = vmatprep.subr.bf16.mxu0 %v1213
        %1928 = vmatpush1.bf16.msra.mxu0 %v1210
        %1929 = vmatprep.subr.bf16.mxu0 %v1086
        %1930 = vmatpush1.bf16.msra.mxu0 %v1083
        %1931 = vmatprep.subr.bf16.mxu0 %v959
        %1932 = vmatpush1.bf16.msra.mxu0 %v956
        %1933 = vmatprep.subr.bf16.mxu0 0
        %1934 = vmatpush2.bf16.msra.mxu0 0
        %1935 = vmatprep.subr.bf16.mxu0 0
        %1936 = vmatpush2.bf16.msra.mxu0 0
        %1937 = vmatprep.subr.bf16.mxu0 0
        %1938 = vmatpush2.bf16.msra.mxu0 0
        %1939 = vmatprep.subr.bf16.mxu0 0
        %1940 = vmatpush2.bf16.msra.mxu0 0
        %1941 = vmatprep.subr.bf16.mxu0 0
        %1942 = vmatpush2.bf16.msra.mxu0 0
        %1943 = vmatprep.subr.bf16.mxu0 0
        %1944 = vmatpush2.bf16.msra.mxu0 0
        %1945 = vmatprep.subr.bf16.mxu0 0
        %1946 = vmatpush2.bf16.msra.mxu0 0
        %1947 = vmatprep.subr.bf16.mxu0 0
        %1948 = vmatpush2.bf16.msra.mxu0 0
        %1949 = vmatprep.mubr.bf16.mxu0 0
        %1950 = vmatmul.mubr.bf16.gmra.mxu0 %v1842
        %v1951 = vpop.f32.mrf.mxu0
        %v1952 = vadd.f32 0.0, %v1951
        %v1953 = vpop.f32.mrf.mxu0
        %v1954 = vadd.f32 0.0, %v1953
        %v1955 = vpop.f32.mrf.mxu0
        %v1956 = vpop.f32.mrf.mxu0
        %1957 = vdwg.mxu0
        %1958 = vmatprep.subr.bf16.mxu0 0
        %1959 = vmatpush1.bf16.msra.mxu0 0
        %1960 = vmatprep.subr.bf16.mxu0 %v1854
        %1961 = vmatpush1.bf16.msra.mxu0 %v1852
        %1962 = vmatprep.subr.bf16.mxu0 %v1729
        %1963 = vmatpush1.bf16.msra.mxu0 %v1726
        %1964 = vmatprep.subr.bf16.mxu0 %v1602
        %1965 = vmatpush1.bf16.msra.mxu0 %v1599
        %1966 = vmatprep.subr.bf16.mxu0 %v1346
        %1967 = vmatpush1.bf16.msra.mxu0 %v1343
        %1968 = vmatprep.subr.bf16.mxu0 %v1219
        %1969 = vmatpush1.bf16.msra.mxu0 %v1216
        %1970 = vmatprep.subr.bf16.mxu0 %v1092
        %1971 = vmatpush1.bf16.msra.mxu0 %v1089
        %1972 = vmatprep.subr.bf16.mxu0 %v965
        %1973 = vmatpush1.bf16.msra.mxu0 %v962
        %1974 = vmatprep.subr.bf16.mxu0 0
        %1975 = vmatpush2.bf16.msra.mxu0 0
        %1976 = vmatprep.subr.bf16.mxu0 0
        %1977 = vmatpush2.bf16.msra.mxu0 0
        %1978 = vmatprep.subr.bf16.mxu0 0
        %1979 = vmatpush2.bf16.msra.mxu0 0
        %1980 = vmatprep.subr.bf16.mxu0 0
        %1981 = vmatpush2.bf16.msra.mxu0 0
        %1982 = vmatprep.subr.bf16.mxu0 0
        %1983 = vmatpush2.bf16.msra.mxu0 0
        %1984 = vmatprep.subr.bf16.mxu0 0
        %1985 = vmatpush2.bf16.msra.mxu0 0
        %1986 = vmatprep.subr.bf16.mxu0 0
        %1987 = vmatpush2.bf16.msra.mxu0 0
        %1988 = vmatprep.subr.bf16.mxu0 0
        %1989 = vmatpush2.bf16.msra.mxu0 0
        %1990 = vmatprep.mubr.bf16.mxu0 0
        %1991 = vmatmul.mubr.bf16.gmra.mxu0 %v1842
        %v1992 = vpop.f32.mrf.mxu0
        %v1993 = vadd.f32 0.0, %v1992
        %v1994 = vpop.f32.mrf.mxu0
        %v1995 = vadd.f32 0.0, %v1994
        %v1996 = vpop.f32.mrf.mxu0
        %v1997 = vpop.f32.mrf.mxu0
        %1998 = vdwg.mxu0
        %1999 = vmatprep.subr.bf16.mxu0 0
        %2000 = vmatpush1.bf16.msra.mxu0 0
        %2001 = vmatprep.subr.bf16.mxu0 %v1858
        %2002 = vmatpush1.bf16.msra.mxu0 %v1856
        %2003 = vmatprep.subr.bf16.mxu0 %v1735
        %2004 = vmatpush1.bf16.msra.mxu0 %v1732
        %2005 = vmatprep.subr.bf16.mxu0 %v1608
        %2006 = vmatpush1.bf16.msra.mxu0 %v1605
        %2007 = vmatprep.subr.bf16.mxu0 %v1352
        %2008 = vmatpush1.bf16.msra.mxu0 %v1349
        %2009 = vmatprep.subr.bf16.mxu0 %v1225
        %2010 = vmatpush1.bf16.msra.mxu0 %v1222
        %2011 = vmatprep.subr.bf16.mxu0 %v1098
        %2012 = vmatpush1.bf16.msra.mxu0 %v1095
        %2013 = vmatprep.subr.bf16.mxu0 %v971
        %2014 = vmatpush1.bf16.msra.mxu0 %v968
        %2015 = vmatprep.subr.bf16.mxu0 0
        %2016 = vmatpush2.bf16.msra.mxu0 0
        %2017 = vmatprep.subr.bf16.mxu0 0
        %2018 = vmatpush2.bf16.msra.mxu0 0
        %2019 = vmatprep.subr.bf16.mxu0 0
        %2020 = vmatpush2.bf16.msra.mxu0 0
        %2021 = vmatprep.subr.bf16.mxu0 0
        %2022 = vmatpush2.bf16.msra.mxu0 0
        %2023 = vmatprep.subr.bf16.mxu0 0
        %2024 = vmatpush2.bf16.msra.mxu0 0
        %2025 = vmatprep.subr.bf16.mxu0 0
        %2026 = vmatpush2.bf16.msra.mxu0 0
        %2027 = vmatprep.subr.bf16.mxu0 0
        %2028 = vmatpush2.bf16.msra.mxu0 0
        %2029 = vmatprep.subr.bf16.mxu0 0
        %2030 = vmatpush2.bf16.msra.mxu0 0
        %2031 = vmatprep.mubr.bf16.mxu0 0
        %2032 = vmatmul.mubr.bf16.gmra.mxu0 %v1842
        %v2033 = vpop.f32.mrf.mxu0
        %v2034 = vadd.f32 0.0, %v2033
        %v2035 = vpop.f32.mrf.mxu0
        %v2036 = vadd.f32 0.0, %v2035
        %v2037 = vpop.f32.mrf.mxu0
        %v2038 = vpop.f32.mrf.mxu0
        %2039 = vdwg.mxu0
        %2040 = vmatprep.subr.bf16.mxu0 0
        %2041 = vmatpush1.bf16.msra.mxu0 0
        %2042 = vmatprep.subr.bf16.mxu0 %v1862
        %2043 = vmatpush1.bf16.msra.mxu0 %v1860
        %2044 = vmatprep.subr.bf16.mxu0 %v1741
        %2045 = vmatpush1.bf16.msra.mxu0 %v1738
        %2046 = vmatprep.subr.bf16.mxu0 %v1614
        %2047 = vmatpush1.bf16.msra.mxu0 %v1611
        %2048 = vmatprep.subr.bf16.mxu0 %v1358
        %2049 = vmatpush1.bf16.msra.mxu0 %v1355
        %2050 = vmatprep.subr.bf16.mxu0 %v1231
        %2051 = vmatpush1.bf16.msra.mxu0 %v1228
        %2052 = vmatprep.subr.bf16.mxu0 %v1104
        %2053 = vmatpush1.bf16.msra.mxu0 %v1101
        %2054 = vmatprep.subr.bf16.mxu0 %v977
        %2055 = vmatpush1.bf16.msra.mxu0 %v974
        %2056 = vmatprep.subr.bf16.mxu0 0
        %2057 = vmatpush2.bf16.msra.mxu0 0
        %2058 = vmatprep.subr.bf16.mxu0 0
        %2059 = vmatpush2.bf16.msra.mxu0 0
        %2060 = vmatprep.subr.bf16.mxu0 0
        %2061 = vmatpush2.bf16.msra.mxu0 0
        %2062 = vmatprep.subr.bf16.mxu0 0
        %2063 = vmatpush2.bf16.msra.mxu0 0
        %2064 = vmatprep.subr.bf16.mxu0 0
        %2065 = vmatpush2.bf16.msra.mxu0 0
        %2066 = vmatprep.subr.bf16.mxu0 0
        %2067 = vmatpush2.bf16.msra.mxu0 0
        %2068 = vmatprep.subr.bf16.mxu0 0
        %2069 = vmatpush2.bf16.msra.mxu0 0
        %2070 = vmatprep.subr.bf16.mxu0 0
        %2071 = vmatpush2.bf16.msra.mxu0 0
        %2072 = vmatprep.mubr.bf16.mxu0 0
        %2073 = vmatmul.mubr.bf16.gmra.mxu0 %v1842
        %v2074 = vpop.f32.mrf.mxu0
        %v2075 = vadd.f32 0.0, %v2074
        %v2076 = vpop.f32.mrf.mxu0
        %v2077 = vadd.f32 0.0, %v2076
        %v2078 = vpop.f32.mrf.mxu0
        %v2079 = vpop.f32.mrf.mxu0
        %2080 = vdwg.mxu0
        %2081 = vmatprep.subr.bf16.mxu0 0
        %2082 = vmatpush1.bf16.msra.mxu0 0
        %2083 = vmatprep.subr.bf16.mxu0 %v1866
        %2084 = vmatpush1.bf16.msra.mxu0 %v1864
        %2085 = vmatprep.subr.bf16.mxu0 %v1747
        %2086 = vmatpush1.bf16.msra.mxu0 %v1744
        %2087 = vmatprep.subr.bf16.mxu0 %v1620
        %2088 = vmatpush1.bf16.msra.mxu0 %v1617
        %2089 = vmatprep.subr.bf16.mxu0 %v1364
        %2090 = vmatpush1.bf16.msra.mxu0 %v1361
        %2091 = vmatprep.subr.bf16.mxu0 %v1237
        %2092 = vmatpush1.bf16.msra.mxu0 %v1234
        %2093 = vmatprep.subr.bf16.mxu0 %v1110
        %2094 = vmatpush1.bf16.msra.mxu0 %v1107
        %2095 = vmatprep.subr.bf16.mxu0 %v983
        %2096 = vmatpush1.bf16.msra.mxu0 %v980
        %2097 = vmatprep.subr.bf16.mxu0 0
        %2098 = vmatpush2.bf16.msra.mxu0 0
        %2099 = vmatprep.subr.bf16.mxu0 0
        %2100 = vmatpush2.bf16.msra.mxu0 0
        %2101 = vmatprep.subr.bf16.mxu0 0
        %2102 = vmatpush2.bf16.msra.mxu0 0
        %2103 = vmatprep.subr.bf16.mxu0 0
        %2104 = vmatpush2.bf16.msra.mxu0 0
        %2105 = vmatprep.subr.bf16.mxu0 0
        %2106 = vmatpush2.bf16.msra.mxu0 0
        %2107 = vmatprep.subr.bf16.mxu0 0
        %2108 = vmatpush2.bf16.msra.mxu0 0
        %2109 = vmatprep.subr.bf16.mxu0 0
        %2110 = vmatpush2.bf16.msra.mxu0 0
        %2111 = vmatprep.subr.bf16.mxu0 0
        %2112 = vmatpush2.bf16.msra.mxu0 0
        %2113 = vmatprep.mubr.bf16.mxu0 0
        %2114 = vmatmul.mubr.bf16.gmra.mxu0 %v1842
        %v2115 = vpop.f32.mrf.mxu0
        %v2116 = vadd.f32 0.0, %v2115
        %v2117 = vpop.f32.mrf.mxu0
        %v2118 = vadd.f32 0.0, %v2117
        %v2119 = vpop.f32.mrf.mxu0
        %v2120 = vpop.f32.mrf.mxu0
        %2121 = vdwg.mxu0
        %2122 = vmatprep.subr.bf16.mxu0 0
        %2123 = vmatpush1.bf16.msra.mxu0 0
        %2124 = vmatprep.subr.bf16.mxu0 %v1870
        %2125 = vmatpush1.bf16.msra.mxu0 %v1868
        %2126 = vmatprep.subr.bf16.mxu0 %v1753
        %2127 = vmatpush1.bf16.msra.mxu0 %v1750
        %2128 = vmatprep.subr.bf16.mxu0 %v1626
        %2129 = vmatpush1.bf16.msra.mxu0 %v1623
        %2130 = vmatprep.subr.bf16.mxu0 %v1370
        %2131 = vmatpush1.bf16.msra.mxu0 %v1367
        %2132 = vmatprep.subr.bf16.mxu0 %v1243
        %2133 = vmatpush1.bf16.msra.mxu0 %v1240
        %2134 = vmatprep.subr.bf16.mxu0 %v1116
        %2135 = vmatpush1.bf16.msra.mxu0 %v1113
        %2136 = vmatprep.subr.bf16.mxu0 %v989
        %2137 = vmatpush1.bf16.msra.mxu0 %v986
        %2138 = vmatprep.subr.bf16.mxu0 0
        %2139 = vmatpush2.bf16.msra.mxu0 0
        %2140 = vmatprep.subr.bf16.mxu0 0
        %2141 = vmatpush2.bf16.msra.mxu0 0
        %2142 = vmatprep.subr.bf16.mxu0 0
        %2143 = vmatpush2.bf16.msra.mxu0 0
        %2144 = vmatprep.subr.bf16.mxu0 0
        %2145 = vmatpush2.bf16.msra.mxu0 0
        %2146 = vmatprep.subr.bf16.mxu0 0
        %2147 = vmatpush2.bf16.msra.mxu0 0
        %2148 = vmatprep.subr.bf16.mxu0 0
        %2149 = vmatpush2.bf16.msra.mxu0 0
        %2150 = vmatprep.subr.bf16.mxu0 0
        %2151 = vmatpush2.bf16.msra.mxu0 0
        %2152 = vmatprep.subr.bf16.mxu0 0
        %2153 = vmatpush2.bf16.msra.mxu0 0
        %2154 = vmatprep.mubr.bf16.mxu0 0
        %2155 = vmatmul.mubr.bf16.gmra.mxu0 %v1842
        %v2156 = vpop.f32.mrf.mxu0
        %v2157 = vadd.f32 0.0, %v2156
        %v2158 = vpop.f32.mrf.mxu0
        %v2159 = vadd.f32 0.0, %v2158
        %v2160 = vpop.f32.mrf.mxu0
        %v2161 = vpop.f32.mrf.mxu0
        %2162 = vdwg.mxu0
        %2163 = vmatprep.subr.bf16.mxu0 0
        %2164 = vmatpush1.bf16.msra.mxu0 0
        %2165 = vmatprep.subr.bf16.mxu0 %v1874
        %2166 = vmatpush1.bf16.msra.mxu0 %v1872
        %2167 = vmatprep.subr.bf16.mxu0 %v1759
        %2168 = vmatpush1.bf16.msra.mxu0 %v1756
        %2169 = vmatprep.subr.bf16.mxu0 %v1632
        %2170 = vmatpush1.bf16.msra.mxu0 %v1629
        %2171 = vmatprep.subr.bf16.mxu0 %v1376
        %2172 = vmatpush1.bf16.msra.mxu0 %v1373
        %2173 = vmatprep.subr.bf16.mxu0 %v1249
        %2174 = vmatpush1.bf16.msra.mxu0 %v1246
        %2175 = vmatprep.subr.bf16.mxu0 %v1122
        %2176 = vmatpush1.bf16.msra.mxu0 %v1119
        %2177 = vmatprep.subr.bf16.mxu0 %v995
        %2178 = vmatpush1.bf16.msra.mxu0 %v992
        %2179 = vmatprep.subr.bf16.mxu0 0
        %2180 = vmatpush2.bf16.msra.mxu0 0
        %2181 = vmatprep.subr.bf16.mxu0 0
        %2182 = vmatpush2.bf16.msra.mxu0 0
        %2183 = vmatprep.subr.bf16.mxu0 0
        %2184 = vmatpush2.bf16.msra.mxu0 0
        %2185 = vmatprep.subr.bf16.mxu0 0
        %2186 = vmatpush2.bf16.msra.mxu0 0
        %2187 = vmatprep.subr.bf16.mxu0 0
        %2188 = vmatpush2.bf16.msra.mxu0 0
        %2189 = vmatprep.subr.bf16.mxu0 0
        %2190 = vmatpush2.bf16.msra.mxu0 0
        %2191 = vmatprep.subr.bf16.mxu0 0
        %2192 = vmatpush2.bf16.msra.mxu0 0
        %2193 = vmatprep.subr.bf16.mxu0 0
        %2194 = vmatpush2.bf16.msra.mxu0 0
        %2195 = vmatprep.mubr.bf16.mxu0 0
        %2196 = vmatmul.mubr.bf16.gmra.mxu0 %v1842
        %v2197 = vpop.f32.mrf.mxu0
        %v2198 = vadd.f32 0.0, %v2197
        %v2199 = vpop.f32.mrf.mxu0
        %v2200 = vadd.f32 0.0, %v2199
        %v2201 = vpop.f32.mrf.mxu0
        %v2202 = vpop.f32.mrf.mxu0
        %2203 = vdwg.mxu0
        %vm2204 = vcmp.gt.f32.partialorder %v1911, 0.0
        %vm2205 = vcmp.gt.f32.partialorder %v1913, 0.0
        %vm2206 = vcmp.gt.f32.partialorder %v1952, 0.0
        %vm2207 = vcmp.gt.f32.partialorder %v1954, 0.0
        %vm2208 = vcmp.gt.f32.partialorder %v1993, 0.0
        %vm2209 = vcmp.gt.f32.partialorder %v1995, 0.0
        %vm2210 = vcmp.gt.f32.partialorder %v2034, 0.0
        %vm2211 = vcmp.gt.f32.partialorder %v2036, 0.0
        %vm2212 = vcmp.gt.f32.partialorder %v2075, 0.0
        %vm2213 = vcmp.gt.f32.partialorder %v2077, 0.0
        %vm2214 = vcmp.gt.f32.partialorder %v2116, 0.0
        %vm2215 = vcmp.gt.f32.partialorder %v2118, 0.0
        %vm2216 = vcmp.gt.f32.partialorder %v2157, 0.0
        %vm2217 = vcmp.gt.f32.partialorder %v2159, 0.0
        %vm2218 = vcmp.gt.f32.partialorder %v2198, 0.0
        %vm2219 = vcmp.gt.f32.partialorder %v2200, 0.0
        %v2220 = vmul.f32 %v1911, 0.01
        %v2221 = vmul.f32 %v1913, 0.01
        %v2222 = vmul.f32 %v1952, 0.01
        %v2223 = vmul.f32 %v1954, 0.01
        %v2224 = vmul.f32 %v1993, 0.01
        %v2225 = vmul.f32 %v1995, 0.01
        %v2226 = vmul.f32 %v2034, 0.01
        %v2227 = vmul.f32 %v2036, 0.01
        %v2228 = vmul.f32 %v2075, 0.01
        %v2229 = vmul.f32 %v2077, 0.01
        %v2230 = vmul.f32 %v2116, 0.01
        %v2231 = vmul.f32 %v2118, 0.01
        %v2232 = vmul.f32 %v2157, 0.01
        %v2233 = vmul.f32 %v2159, 0.01
        %v2234 = vmul.f32 %v2198, 0.01
        %v2235 = vmul.f32 %v2200, 0.01
        %v2236 = vsel %vm2204, %v1911, %v2220
        %v2237 = vsel %vm2205, %v1913, %v2221
        %v2238 = vsel %vm2206, %v1952, %v2222
        %v2239 = vsel %vm2207, %v1954, %v2223
        %v2240 = vsel %vm2208, %v1993, %v2224
        %v2241 = vsel %vm2209, %v1995, %v2225
        %v2242 = vsel %vm2210, %v2034, %v2226
        %v2243 = vsel %vm2211, %v2036, %v2227
        %v2244 = vsel %vm2212, %v2075, %v2228
        %v2245 = vsel %vm2213, %v2077, %v2229
        %v2246 = vsel %vm2214, %v2116, %v2230
        %v2247 = vsel %vm2215, %v2118, %v2231
        %v2248 = vsel %vm2216, %v2157, %v2232
        %v2249 = vsel %vm2217, %v2159, %v2233
        %v2250 = vsel %vm2218, %v2198, %v2234
        %v2251 = vsel %vm2219, %v2200, %v2235
        %2252 = vst [vmem:[%s172] sm:$0xff] %v2236
        %2253 = vst [vmem:[%s172 + $0x8] sm:$0xff] %v2237
        %2254 = vst [vmem:[%s172 + $0x10] sm:$0xff] %v2238
        %2255 = vst [vmem:[%s172 + $0x18] sm:$0xff] %v2239
        %2256 = vst [vmem:[%s172 + $0x20] sm:$0xff] %v2240
        %2257 = vst [vmem:[%s172 + $0x28] sm:$0xff] %v2241
        %2258 = vst [vmem:[%s172 + $0x30] sm:$0xff] %v2242
        %2259 = vst [vmem:[%s172 + $0x38] sm:$0xff] %v2243
        %2260 = vst [vmem:[%s172 + $0x40] sm:$0xff] %v2244
        %2261 = vst [vmem:[%s172 + $0x48] sm:$0xff] %v2245
        %2262 = vst [vmem:[%s172 + $0x50] sm:$0xff] %v2246
        %2263 = vst [vmem:[%s172 + $0x58] sm:$0xff] %v2247
        %2264 = vst [vmem:[%s172 + $0x60] sm:$0xff] %v2248
        %2265 = vst [vmem:[%s172 + $0x68] sm:$0xff] %v2249
        %2266 = vst [vmem:[%s172 + $0x70] sm:$0xff] %v2250
        %2267 = vst [vmem:[%s172 + $0x78] sm:$0xff] %v2251
        %s2268 = sand.u32 %s75, 1
        %s2269 = scalar_lea.sflag [#allocation4], %s2268
        %s2270 = sand.u32 %s75, 1
        %s2271 = smul.addr %s2270, 128
        %s2272 = scalar_lea.vmem [#allocation7], %s2271
        // Predicated region
        $region37: #{tpu_custom_call.1} parent=27 // pred_check
          %p2273 = pneg %p85
        $region38: #{tpu_custom_call.1} parent=27 // pred_check_branch
          %2275 = sbr.rel (%p2273) target = $region40
        $region39: #{tpu_custom_call.1} parent=27 // pred_region
          %s2277 = ssub.s32 2048, 2048
          %2278 = vsyncadd %s2269, %s2277
          %s2279 = smul.addr %s20, 16
          %s2280 = smul.addr %s2279, 128
          %s2281 = scalar_lea.hbm %s2, %s2280
          %s2283 = sshll.u32 %s2272, 4
          %s2284 = int_to_ptr.vmem [resolvable:$true] %s2283
          %2286 = dma.vmem_to_hbm [thread:$0]  %s2284, 2048, %s2281, %s2269
        $region40: #{tpu_custom_call.1} parent=27 // pred_fallthru
          _
      $region28: #{tpu_custom_call.1} parent=5 // pred_fallthru
        _
      %p2287 = scmp.le.s32.totalorder 2, %s15
      // Predicated region
      $region41: #{tpu_custom_call.1} parent=5 // pred_check
        %p2288 = pneg %p2287
      $region42: #{tpu_custom_call.1} parent=5 // pred_check_branch
        %2290 = sbr.rel (%p2288) target = $region44
      $region43: #{tpu_custom_call.1} parent=5 // pred_region
        %s2291 = ssub.s32 %s15, 2
        // Predicated region
        $region45: #{tpu_custom_call.1} parent=43 // pred_check
          %p2292 = pneg %p91
        $region46: #{tpu_custom_call.1} parent=43 // pred_check_branch
          %2294 = sbr.rel (%p2292) target = $region48
        $region47: #{tpu_custom_call.1} parent=43 // pred_region
          %s2295 = sand.u32 %s76, 1
          %s2296 = scalar_lea.sflag [#allocation4], %s2295
          %s2297 = sand.u32 %s76, 1
          %s2298 = smul.addr %s2297, 128
          %s2299 = scalar_lea.vmem [#allocation7], %s2298
          %2300 = dma.done %s2296, 2048
        $region48: #{tpu_custom_call.1} parent=43 // pred_fallthru
          _
      $region44: #{tpu_custom_call.1} parent=5 // pred_fallthru
        _
    $region6: #{tpu_custom_call.1} parent=1 // loop_footer
      %s19 = sadd.s32 1, %s15
    $region7: #{tpu_custom_call.1} parent=1 // loop_footer_branch
      %14 = sbr.rel target = $region3
    $region8: #{tpu_custom_call.1} parent=1 // loop_exit
      _
    %2301 = vsyncpa [#allocation3], 1
    %s2302 = scalar_lea.sflag [#allocation3], 1
    %2303 = vsyncpa %s2302, 1
    %2304 = vsyncpa [#allocation6], 1
    %2305 = vsyncpa [#allocation4], 1
    %s2306 = scalar_lea.sflag [#allocation4], 1
    %2307 = vsyncpa %s2306, 1

</llo_original>
